<compile_context>
chip_gen: v6e
topology: v6e:2x2x1
jax: 0.10.0
libtpu: 0.0.40
codegen_flags: <defaults>
</compile_context>

<pallas_src>
import functools

import numpy as np
import jax
import jax.numpy as jnp
from jax.experimental import pallas as pl
from jax.experimental.pallas import tpu as pltpu


ATTN_NODE_TILE = 1024   # q/p tiles are tn x 512 bf16 -> ~4.3 MiB double-buffered
SET_NODE_TILE = 8192    # set_fn tiles are only tn x 16 -> cheap, go big
EDGE_TILE = 1024        # 2 x [te,512] bf16 inputs double-buffered ~ 4 MiB
BN_EPS = 1e-5


def _detect_wide_mxu():
    """True on v6e / v7x (2x256^2 MXU) -> pack attention heads in pairs."""
    try:
        kind = jax.devices()[0].device_kind.lower()
        return ("v6" in kind) or ("v7" in kind)
    except Exception:
        return False


_WIDE_MXU = _detect_wide_mxu()


# ----------------------------------------------------------------------------
# helpers
# ----------------------------------------------------------------------------
def _round_up(x, m):
    return ((x + m - 1) // m) * m


def _tiled_spec(block_shape):
    """Block tiled along axis 0; all other axes full."""
    zeros = (0,) * (len(block_shape) - 1)
    return pl.BlockSpec(block_shape, lambda i: (i,) + zeros)


def _resident_spec(shape):
    """Full-array block with constant index -> stays resident in VMEM."""
    zeros = (0,) * len(shape)
    return pl.BlockSpec(shape, lambda i: zeros)


def _partial_spec(tail_shape):
    """Per-grid-step partial-sum block: leading axis indexed by grid step."""
    zeros = (0,) * len(tail_shape)
    return pl.BlockSpec((1,) + tail_shape, lambda i: (i,) + zeros)


# ----------------------------------------------------------------------------
# Kernel 1: attention per-node precompute
#   Q = x @ W_all + b            (heads fused: W_all = [F, H*D])
#   P[:, blk] = Q[:, blk] @ A_blk   (A_blk = 128x128 per head, or 256x256
#                                    block-diag head pair on v6e/v7x)
#   Q and P are stored bf16 (only consumed as bf16 matmul / product operands).
# ----------------------------------------------------------------------------
def attn_node_kernel(x_ref, w_ref, b_ref, a_ref, q_ref, p_ref):
    x16 = x_ref[...].astype(jnp.bfloat16)
    q = jnp.dot(x16, w_ref[...], preferred_element_type=jnp.float32) + b_ref[...]
    q16 = q.astype(jnp.bfloat16)
    q_ref[...] = q16
    n_blk, bd, _ = a_ref.shape
    for h in range(n_blk):                       # static unroll (<= 4 blocks)
        p = jnp.dot(q16[:, h * bd:(h + 1) * bd], a_ref[h],
                    preferred_element_type=jnp.float32)
        p_ref[:, h * bd:(h + 1) * bd] = p.astype(p_ref.dtype)


# ----------------------------------------------------------------------------
# Kernel 2: per-edge bilinear attention score
#   score_e = (1/H) * sum_k P[row_e, k] * Q[col_e, k]
#   inputs arrive gathered (NO transpose) as [tb, 128, HD] bf16 blocks;
#   reduce over the lane (HD) axis; store a lane-dense [tb, 128] block.
# ----------------------------------------------------------------------------
def edge_score_kernel(pr_ref, qc_ref, out_ref, *, inv_heads):
    prod = pr_ref[...].astype(jnp.float32) * qc_ref[...].astype(jnp.float32)
    out_ref[...] = jnp.sum(prod, axis=-1) * inv_heads          # [tb, 128]


# ----------------------------------------------------------------------------
# Kernel 3 (set_fn pass 1): filtration Linear#1 + ReLU, then the composed
# weight Wc = W2t @ Wfold (persistence-fallback repeat + set_fn Linear folded),
# ReLU, plus per-graph partial sums (grid-indexed, reduced in XLA).
# ----------------------------------------------------------------------------
def setfn_pass1_kernel(x_ref, oht_ref, fw1_ref, fb1_ref, wc_ref, bc_ref,
                       h1_ref, s1_ref):
    x16 = x_ref[...].astype(jnp.bfloat16)
    fh = jnp.maximum(
        jnp.dot(x16, fw1_ref[...], preferred_element_type=jnp.float32)
        + fb1_ref[...], 0.0)
    h1 = jnp.maximum(
        jnp.dot(fh.astype(jnp.bfloat16), wc_ref[...],
                preferred_element_type=jnp.float32) + bc_ref[...], 0.0)
    h1_ref[...] = h1.astype(h1_ref.dtype)
    # per-graph partial sum (padded rows have all-zero one-hot columns)
    s1_ref[0] = jnp.dot(oht_ref[...], h1.astype(jnp.bfloat16),
                        preferred_element_type=jnp.float32)


# ----------------------------------------------------------------------------
# Kernel 4 (set_fn pass 2): DeepSetLayer(out, out) + ReLU + per-graph partials
# ----------------------------------------------------------------------------
def setfn_pass2_kernel(h1_ref, oh_ref, oht_ref, lam1_ref, g1w_ref, g1b_ref,
                       h2_ref, s2_ref):
    h2 = (jnp.dot(h1_ref[...], g1w_ref[...], preferred_element_type=jnp.float32)
          + g1b_ref[...]
          - jnp.dot(oh_ref[...], lam1_ref[...],
                    preferred_element_type=jnp.float32))
    h2 = jnp.maximum(h2, 0.0)
    h2_ref[...] = h2.astype(h2_ref.dtype)
    s2_ref[0] = jnp.dot(oht_ref[...], h2.astype(jnp.bfloat16),
                        preferred_element_type=jnp.float32)


# ----------------------------------------------------------------------------
# Kernel 5 (set_fn pass 3): DeepSetLayer(out, F) + ReLU + BN partial sum/sumsq
# ----------------------------------------------------------------------------
def setfn_pass3_kernel(h2_ref, oh_ref, lam2_ref, g2w_ref, g2b_ref,
                       r_ref, bsum_ref, bsq_ref):
    oh = oh_ref[...]
    h3 = (jnp.dot(h2_ref[...], g2w_ref[...], preferred_element_type=jnp.float32)
          + g2b_ref[...]
          - jnp.dot(oh, lam2_ref[...], preferred_element_type=jnp.float32))
    r = jnp.maximum(h3, 0.0)
    r_ref[...] = r
    # mask padded rows (all-zero one-hot row) out of the batch-norm statistics
    mask = jnp.sum(oh.astype(jnp.float32), axis=-1, keepdims=True)   # [tn, 1]
    rm = r * mask
    bsum_ref[0] = jnp.sum(rm, axis=0, keepdims=True)                 # [1, F]
    bsq_ref[0] = jnp.sum(rm * rm, axis=0, keepdims=True)


# ----------------------------------------------------------------------------
# Kernel 6 (set_fn pass 4): apply BatchNorm (precomputed scale/shift) + residual
# ----------------------------------------------------------------------------
def setfn_apply_kernel(x_ref, r_ref, scale_ref, shift_ref, out_ref):
    out_ref[...] = x_ref[...] + r_ref[...] * scale_ref[...] + shift_ref[...]


# ----------------------------------------------------------------------------
# Forward pass (jitted; no host syncs)
# ----------------------------------------------------------------------------
def _togl_forward_impl(params, x, edge_index, batch, rng_key, *, n_graphs):
    f32, bf16 = jnp.float32, jnp.bfloat16
    n_nodes, n_features = x.shape
    n_edges = edge_index.shape[1]
    out_dim = params["set_Wlt"].shape[1]
    num_heads, att_dim, _ = params["att_A"].shape
    hd = num_heads * att_dim

    # ---- weight prep (tiny, traced once) ------------------------------------
    w_att = params["att_Wt"].astype(bf16)                     # [F, H*D]
    b_att = params["att_b"]                                    # [1, H*D]
    a_att = params["att_A"].astype(bf16)                       # [H, D, D]
    if _WIDE_MXU and num_heads % 2 == 0:
        # pack head pairs into 2D x 2D block-diagonal A (fills 256-wide MXU)
        a_pk = jnp.zeros((num_heads // 2, 2 * att_dim, 2 * att_dim), bf16)
        a_pk = a_pk.at[:, :att_dim, :att_dim].set(a_att[0::2])
        a_pk = a_pk.at[:, att_dim:, att_dim:].set(a_att[1::2])
        a_att = a_pk

    fw1 = params["filt_W1t"].astype(bf16)                      # [F, hidden]
    fb1 = params["filt_b1"]                                     # [1, hidden]
    # x0 = repeat(filtered_v, 2, axis=1) folded: Wfold = Wl[0::2] + Wl[1::2];
    # then the second filtration Linear folded in: Wc = W2t @ Wfold (exact).
    wl = params["set_Wlt"]                                      # [2*nf, out]
    w_fold = wl[0::2] + wl[1::2]                                # [nf, out]
    wc = jnp.dot(params["filt_W2t"], w_fold).astype(bf16)      # [hidden, out]
    bc = jnp.dot(params["filt_b2"], w_fold) + params["set_bl"]  # [1, out]
    g1w = params["ds1_GWt"].astype(bf16)
    g1b = params["ds1_Gb"]
    g2w = params["ds2_GWt"].astype(bf16)
    g2b = params["ds2_Gb"]

    # ---- per-kernel tiling / padding (all static) ----------------------------
    tn_attn = min(ATTN_NODE_TILE, _round_up(n_nodes, 8))
    n_pad_a = _round_up(n_nodes, tn_attn)
    tn_set = min(SET_NODE_TILE, _round_up(n_nodes, 8))
    n_pad_s = _round_up(n_nodes, tn_set)
    te = min(EDGE_TILE, _round_up(max(n_edges, 1), 128))
    e_pad = _round_up(max(n_edges, 1), te)

    x_attn = jnp.pad(x, ((0, n_pad_a - n_nodes), (0, 0))) if n_pad_a > n_nodes else x
    x_set = jnp.pad(x, ((0, n_pad_s - n_nodes), (0, 0))) if n_pad_s > n_nodes else x
    if n_pad_s > n_nodes:
        batch_pad = jnp.concatenate(
            [batch, jnp.full((n_pad_s - n_nodes,), -1, dtype=batch.dtype)])
    else:
        batch_pad = batch

    # one-hot (and its transpose) built directly; padded rows (-1) -> all zero
    g_ids = jnp.arange(n_graphs, dtype=batch.dtype)
    onehot = (batch_pad[:, None] == g_ids[None, :]).astype(bf16)   # [Np, G]
    onehot_t = (g_ids[:, None] == batch_pad[None, :]).astype(bf16)  # [G, Np]
    counts = jnp.sum(onehot.astype(f32), axis=0)
    inv_counts = (1.0 / jnp.maximum(counts, 1.0)).reshape(n_graphs, 1)

    # ---- GraphAttentionLayer: per-node precompute (parallel over node tiles) -
    q_all, p_all = pl.pallas_call(
        attn_node_kernel,
        grid=(n_pad_a // tn_attn,),
        in_specs=[_tiled_spec((tn_attn, n_features)),
                  _resident_spec(w_att.shape),
                  _resident_spec(b_att.shape),
                  _resident_spec(a_att.shape)],
        out_specs=(_tiled_spec((tn_attn, hd)), _tiled_spec((tn_attn, hd))),
        out_shape=(jax.ShapeDtypeStruct((n_pad_a, hd), bf16),
                   jax.ShapeDtypeStruct((n_pad_a, hd), bf16)),
        compiler_params=pltpu.CompilerParams(
            dimension_semantics=("parallel",)),
    )(x_attn, w_att, b_att, a_att)

    # ---- per-edge bilinear scores (gather without transpose, lane-dense out) -
    row, col = edge_index[0], edge_index[1]
    pad_e = e_pad - n_edges
    if pad_e:
        zpad = jnp.zeros((pad_e,), dtype=row.dtype)
        row = jnp.concatenate([row, zpad])
        col = jnp.concatenate([col, zpad])
    p_row = jnp.take(p_all, row, axis=0).reshape(e_pad // 128, 128, hd)
    q_col = jnp.take(q_all, col, axis=0).reshape(e_pad // 128, 128, hd)
    tb = te // 128

    scores = pl.pallas_call(
        functools.partial(edge_score_kernel, inv_heads=1.0 / num_heads),
        grid=(e_pad // te,),
        in_specs=[pl.BlockSpec((tb, 128, hd), lambda i: (i, 0, 0)),
                  pl.BlockSpec((tb, 128, hd), lambda i: (i, 0, 0))],
        out_specs=pl.BlockSpec((tb, 128), lambda i: (i, 0)),
        out_shape=jax.ShapeDtypeStruct((e_pad // 128, 128), f32),
        compiler_params=pltpu.CompilerParams(
            dimension_semantics=("parallel",)),
    )(p_row, q_col).reshape(-1)[:n_edges]

    # ---- binary Gumbel-softmax (matches the module's binary_gumbel_softmax:
    #      single Gumbel noise, sigmoid, hard threshold), forward value only --
    u = jax.random.uniform(rng_key, scores.shape,
                           minval=1e-6, maxval=1.0 - 1e-6)
    gumbel = -jnp.log(-jnp.log(u))
    y_soft = jax.nn.sigmoid(scores + gumbel)                    # tau = 1
    sampled_edges = (y_soft > 0.5).astype(f32)

    node_grid = (n_pad_s // tn_set,)
    nts = n_pad_s // tn_set

    # ---- set_fn pass 1: filtration + folded Linear + per-graph partial sums --
    h1, s1p = pl.pallas_call(
        setfn_pass1_kernel,
        grid=node_grid,
        in_specs=[_tiled_spec((tn_set, n_features)),
                  pl.BlockSpec((n_graphs, tn_set), lambda i: (0, i)),
                  _resident_spec(fw1.shape),
                  _resident_spec(fb1.shape),
                  _resident_spec(wc.shape),
                  _resident_spec(bc.shape)],
        out_specs=(_tiled_spec((tn_set, out_dim)),
                   _partial_spec((n_graphs, out_dim))),
        out_shape=(jax.ShapeDtypeStruct((n_pad_s, out_dim), bf16),
                   jax.ShapeDtypeStruct((nts, n_graphs, out_dim), f32)),
        compiler_params=pltpu.CompilerParams(
            dimension_semantics=("parallel",)),
    )(x_set, onehot_t, fw1, fb1, wc, bc)

    s1 = jnp.sum(s1p, axis=0)                                   # [G, out]
    lam1 = jnp.dot(s1 * inv_counts, params["ds1_LWt"]).astype(bf16)

    # ---- set_fn pass 2: DeepSetLayer(out, out) + ReLU -------------------------
    h2, s2p = pl.pallas_call(
        setfn_pass2_kernel,
        grid=node_grid,
        in_specs=[_tiled_spec((tn_set, out_dim)),
                  _tiled_spec((tn_set, n_graphs)),
                  pl.BlockSpec((n_graphs, tn_set), lambda i: (0, i)),
                  _resident_spec(lam1.shape),
                  _resident_spec(g1w.shape),
                  _resident_spec(g1b.shape)],
        out_specs=(_tiled_spec((tn_set, out_dim)),
                   _partial_spec((n_graphs, out_dim))),
        out_shape=(jax.ShapeDtypeStruct((n_pad_s, out_dim), bf16),
                   jax.ShapeDtypeStruct((nts, n_graphs, out_dim), f32)),
        compiler_params=pltpu.CompilerParams(
            dimension_semantics=("parallel",)),
    )(h1, onehot, onehot_t, lam1, g1w, g1b)

    s2 = jnp.sum(s2p, axis=0)
    lam2 = jnp.dot(s2 * inv_counts, params["ds2_LWt"]).astype(bf16)

    # ---- set_fn pass 3: DeepSetLayer(out, F) + ReLU + BN partial statistics --
    r, bsump, bsqp = pl.pallas_call(
        setfn_pass3_kernel,
        grid=node_grid,
        in_specs=[_tiled_spec((tn_set, out_dim)),
                  _tiled_spec((tn_set, n_graphs)),
                  _resident_spec(lam2.shape),
                  _resident_spec(g2w.shape),
                  _resident_spec(g2b.shape)],
        out_specs=(_tiled_spec((tn_set, n_features)),
                   _partial_spec((1, n_features)),
                   _partial_spec((1, n_features))),
        out_shape=(jax.ShapeDtypeStruct((n_pad_s, n_features), f32),
                   jax.ShapeDtypeStruct((nts, 1, n_features), f32),
                   jax.ShapeDtypeStruct((nts, 1, n_features), f32)),
        compiler_params=pltpu.CompilerParams(
            dimension_semantics=("parallel",)),
    )(h2, onehot, lam2, g2w, g2b)

    # BatchNorm1d training-mode (biased) batch statistics over real nodes only.
    bsum = jnp.sum(bsump, axis=0)                               # [1, F]
    bsq = jnp.sum(bsqp, axis=0)
    mu = bsum / float(n_nodes)
    var = jnp.maximum(bsq / float(n_nodes) - mu * mu, 0.0)
    scale = params["bn_gamma"] * jax.lax.rsqrt(var + BN_EPS)
    shift = params["bn_beta"] - mu * scale

    # ---- set_fn pass 4: apply BN + residual (parallel over node tiles) -------
    y_pad = pl.pallas_call(
        setfn_apply_kernel,
        grid=node_grid,
        in_specs=[_tiled_spec((tn_set, n_features)),
                  _tiled_spec((tn_set, n_features)),
                  _resident_spec(scale.shape),
                  _resident_spec(shift.shape)],
        out_specs=_tiled_spec((tn_set, n_features)),
        out_shape=jax.ShapeDtypeStruct((n_pad_s, n_features), f32),
        compiler_params=pltpu.CompilerParams(
            dimension_semantics=("parallel",)),
    )(x_set, r, scale, shift)

    return y_pad[:n_nodes], sampled_edges


togl_forward = jax.jit(_togl_forward_impl, static_argnames=("n_graphs",))


# ----------------------------------------------------------------------------
# deterministic parameter construction (shapes from the module's __init__)
# weights stored pre-transposed as [in, out] in f32; cast to bf16 in wrapper.
# ----------------------------------------------------------------------------
def make_params(key, n_features, n_filtrations, hidden_dim, out_dim,
                att_dim=128, num_heads=4):
    keys = jax.random.split(key, 16)
    k = iter(keys)

    def lin(kk, fan_in, fan_out):
        return (jax.random.normal(kk, (fan_in, fan_out), jnp.float32)
                / np.sqrt(fan_in))

    p = {}
    # filtrations: Linear(F, hidden) -> ReLU -> Linear(hidden, n_filt)
    p["filt_W1t"] = lin(next(k), n_features, hidden_dim)
    p["filt_b1"] = jnp.zeros((1, hidden_dim), jnp.float32)
    p["filt_W2t"] = lin(next(k), hidden_dim, n_filtrations)
    p["filt_b2"] = jnp.zeros((1, n_filtrations), jnp.float32)
    # set_fn: Linear(2*n_filt, out_dim)
    p["set_Wlt"] = lin(next(k), 2 * n_filtrations, out_dim)
    p["set_bl"] = jnp.zeros((1, out_dim), jnp.float32)
    # DeepSetLayer(out_dim, out_dim): Gamma (bias), Lambda (no bias)
    p["ds1_GWt"] = lin(next(k), out_dim, out_dim)
    p["ds1_Gb"] = jnp.zeros((1, out_dim), jnp.float32)
    p["ds1_LWt"] = lin(next(k), out_dim, out_dim)
    # DeepSetLayer(out_dim, n_features)
    p["ds2_GWt"] = lin(next(k), out_dim, n_features)
    p["ds2_Gb"] = jnp.zeros((1, n_features), jnp.float32)
    p["ds2_LWt"] = lin(next(k), out_dim, n_features)
    # BatchNorm1d(n_features) default affine init
    p["bn_gamma"] = jnp.ones((1, n_features), jnp.float32)
    p["bn_beta"] = jnp.zeros((1, n_features), jnp.float32)
    # GraphAttentionLayer(n_features, 128, num_heads=4): heads fused -> [F, H*D]
    w_heads = [lin(next(k), n_features, att_dim) for _ in range(num_heads)]
    p["att_Wt"] = jnp.concatenate(w_heads, axis=1)
    p["att_b"] = jnp.zeros((1, num_heads * att_dim), jnp.float32)
    # xavier-uniform(gain=1.414) attention_weights
    limit = 1.414 * np.sqrt(6.0 / (att_dim + att_dim))
    p["att_A"] = jax.random.uniform(
        next(k), (num_heads, att_dim, att_dim), jnp.float32,
        minval=-limit, maxval=limit)
    return p


# ----------------------------------------------------------------------------
if __name__ == "__main__":
    N_FEATURES = 8
    N_FILTRATIONS = 3
    HIDDEN_DIM = 32
    OUT_DIM = 16
    N_PER_GRAPH = 8
    N_GRAPHS = 2
    N_NODES = N_PER_GRAPH * N_GRAPHS

    key = jax.random.PRNGKey(0)
    k_x, k_params, k_gumbel = jax.random.split(key, 3)

    x = jax.random.normal(k_x, (N_NODES, N_FEATURES), jnp.float32)

    # simple chain graphs (both edge directions), concatenated
    edges = []
    for g in range(N_GRAPHS):
        base = g * N_PER_GRAPH
        for i in range(N_PER_GRAPH - 1):
            edges.append((base + i, base + i + 1))
            edges.append((base + i + 1, base + i))
    edge_index = jnp.asarray(np.array(edges, dtype=np.int32).T)      # [2, 28]
    batch = jnp.asarray(
        np.repeat(np.arange(N_GRAPHS), N_PER_GRAPH).astype(np.int32))

    params = make_params(k_params, N_FEATURES, N_FILTRATIONS,
                         HIDDEN_DIM, OUT_DIM)

    y, sampled = togl_forward(params, x, edge_index, batch, k_gumbel,
                              n_graphs=N_GRAPHS)
    y = jax.block_until_ready(y)
    sampled = jax.block_until_ready(sampled)
    assert y.shape == (N_NODES, N_FEATURES)
    assert sampled.shape == (edge_index.shape[1],)
    assert np.all(np.isfinite(np.asarray(y)))
    assert np.all(np.isfinite(np.asarray(sampled)))
    print("KERNEL_OK")
</pallas_src>

<mosaic_0001>
module attributes {stable_mosaic.version = 11 : i64} {
  func.func @setfn_apply_kernel(%arg0: i32, %arg1: memref<16x8xf32, #tpu.memory_space<vmem>>, %arg2: memref<16x8xf32, #tpu.memory_space<vmem>>, %arg3: memref<1x8xf32, #tpu.memory_space<vmem>>, %arg4: memref<1x8xf32, #tpu.memory_space<vmem>>, %arg5: memref<16x8xf32, #tpu.memory_space<vmem>>) attributes {dimension_semantics = [#tpu.dimension_semantics<parallel>], iteration_bounds = array<i64: 1>, scalar_prefetch = 0 : i64, scratch_operands = 0 : i64, tpu.core_type = #tpu.core_type<tc>, window_params = [{transform_indices = @transform_0, window_bounds = array<i64: 16, 8>}, {transform_indices = @transform_1, window_bounds = array<i64: 16, 8>}, {pipeline_mode = #tpu.pipeline_mode<synchronous>, transform_indices = @transform_2, window_bounds = array<i64: 1, 8>}, {pipeline_mode = #tpu.pipeline_mode<synchronous>, transform_indices = @transform_3, window_bounds = array<i64: 1, 8>}, {transform_indices = @transform_4, window_bounds = array<i64: 16, 8>}]} {
    %c0 = arith.constant 0 : index
    %c0_0 = arith.constant 0 : index
    %0 = vector.load %arg1[%c0, %c0_0] : memref<16x8xf32, #tpu.memory_space<vmem>>, vector<16x8xf32>
    %c0_1 = arith.constant 0 : index
    %c0_2 = arith.constant 0 : index
    %1 = vector.load %arg2[%c0_1, %c0_2] : memref<16x8xf32, #tpu.memory_space<vmem>>, vector<16x8xf32>
    %c0_3 = arith.constant 0 : index
    %c0_4 = arith.constant 0 : index
    %2 = vector.load %arg3[%c0_3, %c0_4] : memref<1x8xf32, #tpu.memory_space<vmem>>, vector<1x8xf32>
    %3 = vector.broadcast %2 : vector<1x8xf32> to vector<16x8xf32>
    %4 = arith.mulf %1, %3 : vector<16x8xf32>
    %5 = arith.addf %0, %4 : vector<16x8xf32>
    %c0_5 = arith.constant 0 : index
    %c0_6 = arith.constant 0 : index
    %6 = vector.load %arg4[%c0_5, %c0_6] : memref<1x8xf32, #tpu.memory_space<vmem>>, vector<1x8xf32>
    %7 = vector.broadcast %6 : vector<1x8xf32> to vector<16x8xf32>
    %8 = arith.addf %5, %7 : vector<16x8xf32>
    %c0_7 = arith.constant 0 : index
    %c0_8 = arith.constant 0 : index
    %9 = vector.load %arg5[%c0_7, %c0_8] : memref<16x8xf32, #tpu.memory_space<vmem>>, vector<16x8xf32>
    tpu.vector_store %arg5[%c0_7, %c0_8], %8 {strides = array<i32>} : memref<16x8xf32, #tpu.memory_space<vmem>>, vector<16x8xf32>,
    return
  }
  func.func @transform_0(%arg0: i32) -> (i32, i32) {
    %c0_i32 = arith.constant 0 : i32
    %c0_i32_0 = arith.constant 0 : i32
    return %arg0, %c0_i32 : i32, i32
  }
  func.func @transform_1(%arg0: i32) -> (i32, i32) {
    %c0_i32 = arith.constant 0 : i32
    %c0_i32_0 = arith.constant 0 : i32
    return %arg0, %c0_i32 : i32, i32
  }
  func.func @transform_2(%arg0: i32) -> (i32, i32) {
    %c0_i32 = arith.constant 0 : i32
    %c0_i32_0 = arith.constant 0 : i32
    %c0_i32_1 = arith.constant 0 : i32
    return %c0_i32, %c0_i32_0 : i32, i32
  }
  func.func @transform_3(%arg0: i32) -> (i32, i32) {
    %c0_i32 = arith.constant 0 : i32
    %c0_i32_0 = arith.constant 0 : i32
    %c0_i32_1 = arith.constant 0 : i32
    return %c0_i32, %c0_i32_0 : i32, i32
  }
  func.func @transform_4(%arg0: i32) -> (i32, i32) {
    %c0_i32 = arith.constant 0 : i32
    %c0_i32_0 = arith.constant 0 : i32
    return %arg0, %c0_i32 : i32, i32
  }
}

module attributes {stable_mosaic.version = 11 : i64} {
  func.func @setfn_pass1_kernel(%arg0: i32, %arg1: memref<16x8xf32, #tpu.memory_space<vmem>>, %arg2: memref<2x16xbf16, #tpu.memory_space<vmem>>, %arg3: memref<8x32xbf16, #tpu.memory_space<vmem>>, %arg4: memref<1x32xf32, #tpu.memory_space<vmem>>, %arg5: memref<32x16xbf16, #tpu.memory_space<vmem>>, %arg6: memref<1x16xf32, #tpu.memory_space<vmem>>, %arg7: memref<16x16xbf16, #tpu.memory_space<vmem>>, %arg8: memref<1x2x16xf32, #tpu.memory_space<vmem>>) attributes {dimension_semantics = [#tpu.dimension_semantics<parallel>], iteration_bounds = array<i64: 1>, scalar_prefetch = 0 : i64, scratch_operands = 0 : i64, tpu.core_type = #tpu.core_type<tc>, window_params = [{transform_indices = @transform_0, window_bounds = array<i64: 16, 8>}, {transform_indices = @transform_1, window_bounds = array<i64: 2, 16>}, {pipeline_mode = #tpu.pipeline_mode<synchronous>, transform_indices = @transform_2, window_bounds = array<i64: 8, 32>}, {pipeline_mode = #tpu.pipeline_mode<synchronous>, transform_indices = @transform_3, window_bounds = array<i64: 1, 32>}, {pipeline_mode = #tpu.pipeline_mode<synchronous>, transform_indices = @transform_4, window_bounds = array<i64: 32, 16>}, {pipeline_mode = #tpu.pipeline_mode<synchronous>, transform_indices = @transform_5, window_bounds = array<i64: 1, 16>}, {transform_indices = @transform_6, window_bounds = array<i64: 16, 16>}, {transform_indices = @transform_7, window_bounds = array<i64: 1, 2, 16>}]} {
    %c0 = arith.constant 0 : index
    %c0_0 = arith.constant 0 : index
    %0 = vector.load %arg1[%c0, %c0_0] : memref<16x8xf32, #tpu.memory_space<vmem>>, vector<16x8xf32>
    %1 = arith.truncf %0 : vector<16x8xf32> to vector<16x8xbf16>
    %c0_1 = arith.constant 0 : index
    %c0_2 = arith.constant 0 : index
    %2 = vector.load %arg3[%c0_1, %c0_2] : memref<8x32xbf16, #tpu.memory_space<vmem>>, vector<8x32xbf16>
    %cst = arith.constant dense<0.000000e+00> : vector<16x32xf32>
    %3 = tpu.matmul %1, %2, %cst {dimension_numbers = #tpu.dot_dimension_numbers<[1], [0], [0], [1], [0, 0, 1, 1], [], []>} : vector<16x8xbf16>, vector<8x32xbf16>, vector<16x32xf32> -> vector<16x32xf32>
    %c0_3 = arith.constant 0 : index
    %c0_4 = arith.constant 0 : index
    %4 = vector.load %arg4[%c0_3, %c0_4] : memref<1x32xf32, #tpu.memory_space<vmem>>, vector<1x32xf32>
    %5 = vector.broadcast %4 : vector<1x32xf32> to vector<16x32xf32>
    %6 = arith.addf %3, %5 : vector<16x32xf32>
    %cst_5 = arith.constant 0.000000e+00 : f32
    %7 = vector.broadcast %cst_5 : f32 to vector<16x32xf32>
    %8 = arith.maximumf %6, %7 : vector<16x32xf32>
    %9 = arith.truncf %8 : vector<16x32xf32> to vector<16x32xbf16>
    %c0_6 = arith.constant 0 : index
    %c0_7 = arith.constant 0 : index
    %10 = vector.load %arg5[%c0_6, %c0_7] : memref<32x16xbf16, #tpu.memory_space<vmem>>, vector<32x16xbf16>
    %cst_8 = arith.constant dense<0.000000e+00> : vector<16x16xf32>
    %11 = tpu.matmul %9, %10, %cst_8 {dimension_numbers = #tpu.dot_dimension_numbers<[1], [0], [0], [1], [0, 0, 1, 1], [], []>} : vector<16x32xbf16>, vector<32x16xbf16>, vector<16x16xf32> -> vector<16x16xf32>
    %c0_9 = arith.constant 0 : index
    %c0_10 = arith.constant 0 : index
    %12 = vector.load %arg6[%c0_9, %c0_10] : memref<1x16xf32, #tpu.memory_space<vmem>>, vector<1x16xf32>
    %13 = vector.broadcast %12 : vector<1x16xf32> to vector<16x16xf32>
    %14 = arith.addf %11, %13 : vector<16x16xf32>
    %cst_11 = arith.constant 0.000000e+00 : f32
    %15 = vector.broadcast %cst_11 : f32 to vector<16x16xf32>
    %16 = arith.maximumf %14, %15 : vector<16x16xf32>
    %17 = arith.truncf %16 : vector<16x16xf32> to vector<16x16xbf16>
    %c0_12 = arith.constant 0 : index
    %c0_13 = arith.constant 0 : index
    %18 = vector.load %arg7[%c0_12, %c0_13] : memref<16x16xbf16, #tpu.memory_space<vmem>>, vector<16x16xbf16>
    tpu.vector_store %arg7[%c0_12, %c0_13], %17 {strides = array<i32>} : memref<16x16xbf16, #tpu.memory_space<vmem>>, vector<16x16xbf16>,
    %c0_14 = arith.constant 0 : index
    %c0_15 = arith.constant 0 : index
    %19 = vector.load %arg2[%c0_14, %c0_15] : memref<2x16xbf16, #tpu.memory_space<vmem>>, vector<2x16xbf16>
    %20 = arith.truncf %16 : vector<16x16xf32> to vector<16x16xbf16>
    %cst_16 = arith.constant dense<0.000000e+00> : vector<2x16xf32>
    %21 = tpu.matmul %19, %20, %cst_16 {dimension_numbers = #tpu.dot_dimension_numbers<[1], [0], [0], [1], [0, 0, 1, 1], [], []>} : vector<2x16xbf16>, vector<16x16xbf16>, vector<2x16xf32> -> vector<2x16xf32>
    %c0_17 = arith.constant 0 : index
    %c0_18 = arith.constant 0 : index
    %c0_19 = arith.constant 0 : index
    %22 = vector.load %arg8[%c0_17, %c0_18, %c0_19] : memref<1x2x16xf32, #tpu.memory_space<vmem>>, vector<1x2x16xf32>
    %23 = vector.shape_cast %22 : vector<1x2x16xf32> to vector<2x16xf32>
    %24 = vector.shape_cast %21 : vector<2x16xf32> to vector<1x2x16xf32>
    tpu.vector_store %arg8[%c0_17, %c0_18, %c0_19], %24 {strides = array<i32>} : memref<1x2x16xf32, #tpu.memory_space<vmem>>, vector<1x2x16xf32>,
    return
  }
  func.func @transform_0(%arg0: i32) -> (i32, i32) {
    %c0_i32 = arith.constant 0 : i32
    %c0_i32_0 = arith.constant 0 : i32
    return %arg0, %c0_i32 : i32, i32
  }
  func.func @transform_1(%arg0: i32) -> (i32, i32) {
    %c0_i32 = arith.constant 0 : i32
    %c0_i32_0 = arith.constant 0 : i32
    return %c0_i32, %arg0 : i32, i32
  }
  func.func @transform_2(%arg0: i32) -> (i32, i32) {
    %c0_i32 = arith.constant 0 : i32
    %c0_i32_0 = arith.constant 0 : i32
    %c0_i32_1 = arith.constant 0 : i32
    return %c0_i32, %c0_i32_0 : i32, i32
  }
  func.func @transform_3(%arg0: i32) -> (i32, i32) {
    %c0_i32 = arith.constant 0 : i32
    %c0_i32_0 = arith.constant 0 : i32
    %c0_i32_1 = arith.constant 0 : i32
    return %c0_i32, %c0_i32_0 : i32, i32
  }
  func.func @transform_4(%arg0: i32) -> (i32, i32) {
    %c0_i32 = arith.constant 0 : i32
    %c0_i32_0 = arith.constant 0 : i32
    %c0_i32_1 = arith.constant 0 : i32
    return %c0_i32, %c0_i32_0 : i32, i32
  }
  func.func @transform_5(%arg0: i32) -> (i32, i32) {
    %c0_i32 = arith.constant 0 : i32
    %c0_i32_0 = arith.constant 0 : i32
    %c0_i32_1 = arith.constant 0 : i32
    return %c0_i32, %c0_i32_0 : i32, i32
  }
  func.func @transform_6(%arg0: i32) -> (i32, i32) {
    %c0_i32 = arith.constant 0 : i32
    %c0_i32_0 = arith.constant 0 : i32
    return %arg0, %c0_i32 : i32, i32
  }
  func.func @transform_7(%arg0: i32) -> (i32, i32, i32) {
    %c0_i32 = arith.constant 0 : i32
    %c0_i32_0 = arith.constant 0 : i32
    %c0_i32_1 = arith.constant 0 : i32
    return %arg0, %c0_i32, %c0_i32_0 : i32, i32, i32
  }
}

module attributes {stable_mosaic.version = 11 : i64} {
  func.func @setfn_pass2_kernel(%arg0: i32, %arg1: memref<16x16xbf16, #tpu.memory_space<vmem>>, %arg2: memref<16x2xbf16, #tpu.memory_space<vmem>>, %arg3: memref<2x16xbf16, #tpu.memory_space<vmem>>, %arg4: memref<2x16xbf16, #tpu.memory_space<vmem>>, %arg5: memref<16x16xbf16, #tpu.memory_space<vmem>>, %arg6: memref<1x16xf32, #tpu.memory_space<vmem>>, %arg7: memref<16x16xbf16, #tpu.memory_space<vmem>>, %arg8: memref<1x2x16xf32, #tpu.memory_space<vmem>>) attributes {dimension_semantics = [#tpu.dimension_semantics<parallel>], iteration_bounds = array<i64: 1>, scalar_prefetch = 0 : i64, scratch_operands = 0 : i64, tpu.core_type = #tpu.core_type<tc>, window_params = [{transform_indices = @transform_0, window_bounds = array<i64: 16, 16>}, {transform_indices = @transform_1, window_bounds = array<i64: 16, 2>}, {transform_indices = @transform_2, window_bounds = array<i64: 2, 16>}, {pipeline_mode = #tpu.pipeline_mode<synchronous>, transform_indices = @transform_3, window_bounds = array<i64: 2, 16>}, {pipeline_mode = #tpu.pipeline_mode<synchronous>, transform_indices = @transform_4, window_bounds = array<i64: 16, 16>}, {pipeline_mode = #tpu.pipeline_mode<synchronous>, transform_indices = @transform_5, window_bounds = array<i64: 1, 16>}, {transform_indices = @transform_6, window_bounds = array<i64: 16, 16>}, {transform_indices = @transform_7, window_bounds = array<i64: 1, 2, 16>}]} {
    %c0 = arith.constant 0 : index
    %c0_0 = arith.constant 0 : index
    %0 = vector.load %arg1[%c0, %c0_0] : memref<16x16xbf16, #tpu.memory_space<vmem>>, vector<16x16xbf16>
    %c0_1 = arith.constant 0 : index
    %c0_2 = arith.constant 0 : index
    %1 = vector.load %arg5[%c0_1, %c0_2] : memref<16x16xbf16, #tpu.memory_space<vmem>>, vector<16x16xbf16>
    %cst = arith.constant dense<0.000000e+00> : vector<16x16xf32>
    %2 = tpu.matmul %0, %1, %cst {dimension_numbers = #tpu.dot_dimension_numbers<[1], [0], [0], [1], [0, 0, 1, 1], [], []>} : vector<16x16xbf16>, vector<16x16xbf16>, vector<16x16xf32> -> vector<16x16xf32>
    %c0_3 = arith.constant 0 : index
    %c0_4 = arith.constant 0 : index
    %3 = vector.load %arg6[%c0_3, %c0_4] : memref<1x16xf32, #tpu.memory_space<vmem>>, vector<1x16xf32>
    %4 = vector.broadcast %3 : vector<1x16xf32> to vector<16x16xf32>
    %5 = arith.addf %2, %4 : vector<16x16xf32>
    %c0_5 = arith.constant 0 : index
    %c0_6 = arith.constant 0 : index
    %6 = vector.load %arg2[%c0_5, %c0_6] : memref<16x2xbf16, #tpu.memory_space<vmem>>, vector<16x2xbf16>
    %c0_7 = arith.constant 0 : index
    %c0_8 = arith.constant 0 : index
    %7 = vector.load %arg4[%c0_7, %c0_8] : memref<2x16xbf16, #tpu.memory_space<vmem>>, vector<2x16xbf16>
    %cst_9 = arith.constant dense<0.000000e+00> : vector<16x16xf32>
    %8 = tpu.matmul %6, %7, %cst_9 {dimension_numbers = #tpu.dot_dimension_numbers<[1], [0], [0], [1], [0, 0, 1, 1], [], []>} : vector<16x2xbf16>, vector<2x16xbf16>, vector<16x16xf32> -> vector<16x16xf32>
    %9 = arith.subf %5, %8 : vector<16x16xf32>
    %cst_10 = arith.constant 0.000000e+00 : f32
    %10 = vector.broadcast %cst_10 : f32 to vector<16x16xf32>
    %11 = arith.maximumf %9, %10 : vector<16x16xf32>
    %12 = arith.truncf %11 : vector<16x16xf32> to vector<16x16xbf16>
    %c0_11 = arith.constant 0 : index
    %c0_12 = arith.constant 0 : index
    %13 = vector.load %arg7[%c0_11, %c0_12] : memref<16x16xbf16, #tpu.memory_space<vmem>>, vector<16x16xbf16>
    tpu.vector_store %arg7[%c0_11, %c0_12], %12 {strides = array<i32>} : memref<16x16xbf16, #tpu.memory_space<vmem>>, vector<16x16xbf16>,
    %c0_13 = arith.constant 0 : index
    %c0_14 = arith.constant 0 : index
    %14 = vector.load %arg3[%c0_13, %c0_14] : memref<2x16xbf16, #tpu.memory_space<vmem>>, vector<2x16xbf16>
    %15 = arith.truncf %11 : vector<16x16xf32> to vector<16x16xbf16>
    %cst_15 = arith.constant dense<0.000000e+00> : vector<2x16xf32>
    %16 = tpu.matmul %14, %15, %cst_15 {dimension_numbers = #tpu.dot_dimension_numbers<[1], [0], [0], [1], [0, 0, 1, 1], [], []>} : vector<2x16xbf16>, vector<16x16xbf16>, vector<2x16xf32> -> vector<2x16xf32>
    %c0_16 = arith.constant 0 : index
    %c0_17 = arith.constant 0 : index
    %c0_18 = arith.constant 0 : index
    %17 = vector.load %arg8[%c0_16, %c0_17, %c0_18] : memref<1x2x16xf32, #tpu.memory_space<vmem>>, vector<1x2x16xf32>
    %18 = vector.shape_cast %17 : vector<1x2x16xf32> to vector<2x16xf32>
    %19 = vector.shape_cast %16 : vector<2x16xf32> to vector<1x2x16xf32>
    tpu.vector_store %arg8[%c0_16, %c0_17, %c0_18], %19 {strides = array<i32>} : memref<1x2x16xf32, #tpu.memory_space<vmem>>, vector<1x2x16xf32>,
    return
  }
  func.func @transform_0(%arg0: i32) -> (i32, i32) {
    %c0_i32 = arith.constant 0 : i32
    %c0_i32_0 = arith.constant 0 : i32
    return %arg0, %c0_i32 : i32, i32
  }
  func.func @transform_1(%arg0: i32) -> (i32, i32) {
    %c0_i32 = arith.constant 0 : i32
    %c0_i32_0 = arith.constant 0 : i32
    return %arg0, %c0_i32 : i32, i32
  }
  func.func @transform_2(%arg0: i32) -> (i32, i32) {
    %c0_i32 = arith.constant 0 : i32
    %c0_i32_0 = arith.constant 0 : i32
    return %c0_i32, %arg0 : i32, i32
  }
  func.func @transform_3(%arg0: i32) -> (i32, i32) {
    %c0_i32 = arith.constant 0 : i32
    %c0_i32_0 = arith.constant 0 : i32
    %c0_i32_1 = arith.constant 0 : i32
    return %c0_i32, %c0_i32_0 : i32, i32
  }
  func.func @transform_4(%arg0: i32) -> (i32, i32) {
    %c0_i32 = arith.constant 0 : i32
    %c0_i32_0 = arith.constant 0 : i32
    %c0_i32_1 = arith.constant 0 : i32
    return %c0_i32, %c0_i32_0 : i32, i32
  }
  func.func @transform_5(%arg0: i32) -> (i32, i32) {
    %c0_i32 = arith.constant 0 : i32
    %c0_i32_0 = arith.constant 0 : i32
    %c0_i32_1 = arith.constant 0 : i32
    return %c0_i32, %c0_i32_0 : i32, i32
  }
  func.func @transform_6(%arg0: i32) -> (i32, i32) {
    %c0_i32 = arith.constant 0 : i32
    %c0_i32_0 = arith.constant 0 : i32
    return %arg0, %c0_i32 : i32, i32
  }
  func.func @transform_7(%arg0: i32) -> (i32, i32, i32) {
    %c0_i32 = arith.constant 0 : i32
    %c0_i32_0 = arith.constant 0 : i32
    %c0_i32_1 = arith.constant 0 : i32
    return %arg0, %c0_i32, %c0_i32_0 : i32, i32, i32
  }
}

module attributes {stable_mosaic.version = 11 : i64} {
  func.func @setfn_pass3_kernel(%arg0: i32, %arg1: memref<16x16xbf16, #tpu.memory_space<vmem>>, %arg2: memref<16x2xbf16, #tpu.memory_space<vmem>>, %arg3: memref<2x8xbf16, #tpu.memory_space<vmem>>, %arg4: memref<16x8xbf16, #tpu.memory_space<vmem>>, %arg5: memref<1x8xf32, #tpu.memory_space<vmem>>, %arg6: memref<16x8xf32, #tpu.memory_space<vmem>>, %arg7: memref<1x1x8xf32, #tpu.memory_space<vmem>>, %arg8: memref<1x1x8xf32, #tpu.memory_space<vmem>>) attributes {dimension_semantics = [#tpu.dimension_semantics<parallel>], iteration_bounds = array<i64: 1>, scalar_prefetch = 0 : i64, scratch_operands = 0 : i64, tpu.core_type = #tpu.core_type<tc>, window_params = [{transform_indices = @transform_0, window_bounds = array<i64: 16, 16>}, {transform_indices = @transform_1, window_bounds = array<i64: 16, 2>}, {pipeline_mode = #tpu.pipeline_mode<synchronous>, transform_indices = @transform_2, window_bounds = array<i64: 2, 8>}, {pipeline_mode = #tpu.pipeline_mode<synchronous>, transform_indices = @transform_3, window_bounds = array<i64: 16, 8>}, {pipeline_mode = #tpu.pipeline_mode<synchronous>, transform_indices = @transform_4, window_bounds = array<i64: 1, 8>}, {transform_indices = @transform_5, window_bounds = array<i64: 16, 8>}, {transform_indices = @transform_6, window_bounds = array<i64: 1, 1, 8>}, {transform_indices = @transform_7, window_bounds = array<i64: 1, 1, 8>}]} {
    %c0 = arith.constant 0 : index
    %c0_0 = arith.constant 0 : index
    %0 = vector.load %arg2[%c0, %c0_0] : memref<16x2xbf16, #tpu.memory_space<vmem>>, vector<16x2xbf16>
    %c0_1 = arith.constant 0 : index
    %c0_2 = arith.constant 0 : index
    %1 = vector.load %arg1[%c0_1, %c0_2] : memref<16x16xbf16, #tpu.memory_space<vmem>>, vector<16x16xbf16>
    %c0_3 = arith.constant 0 : index
    %c0_4 = arith.constant 0 : index
    %2 = vector.load %arg4[%c0_3, %c0_4] : memref<16x8xbf16, #tpu.memory_space<vmem>>, vector<16x8xbf16>
    %cst = arith.constant dense<0.000000e+00> : vector<16x8xf32>
    %3 = tpu.matmul %1, %2, %cst {dimension_numbers = #tpu.dot_dimension_numbers<[1], [0], [0], [1], [0, 0, 1, 1], [], []>} : vector<16x16xbf16>, vector<16x8xbf16>, vector<16x8xf32> -> vector<16x8xf32>
    %c0_5 = arith.constant 0 : index
    %c0_6 = arith.constant 0 : index
    %4 = vector.load %arg5[%c0_5, %c0_6] : memref<1x8xf32, #tpu.memory_space<vmem>>, vector<1x8xf32>
    %5 = vector.broadcast %4 : vector<1x8xf32> to vector<16x8xf32>
    %6 = arith.addf %3, %5 : vector<16x8xf32>
    %c0_7 = arith.constant 0 : index
    %c0_8 = arith.constant 0 : index
    %7 = vector.load %arg3[%c0_7, %c0_8] : memref<2x8xbf16, #tpu.memory_space<vmem>>, vector<2x8xbf16>
    %cst_9 = arith.constant dense<0.000000e+00> : vector<16x8xf32>
    %8 = tpu.matmul %0, %7, %cst_9 {dimension_numbers = #tpu.dot_dimension_numbers<[1], [0], [0], [1], [0, 0, 1, 1], [], []>} : vector<16x2xbf16>, vector<2x8xbf16>, vector<16x8xf32> -> vector<16x8xf32>
    %9 = arith.subf %6, %8 : vector<16x8xf32>
    %cst_10 = arith.constant 0.000000e+00 : f32
    %10 = vector.broadcast %cst_10 : f32 to vector<16x8xf32>
    %11 = arith.maximumf %9, %10 : vector<16x8xf32>
    %c0_11 = arith.constant 0 : index
    %c0_12 = arith.constant 0 : index
    %12 = vector.load %arg6[%c0_11, %c0_12] : memref<16x8xf32, #tpu.memory_space<vmem>>, vector<16x8xf32>
    tpu.vector_store %arg6[%c0_11, %c0_12], %11 {strides = array<i32>} : memref<16x8xf32, #tpu.memory_space<vmem>>, vector<16x8xf32>,
    %13 = arith.extf %0 : vector<16x2xbf16> to vector<16x2xf32>
    %cst_13 = arith.constant dense<0.000000e+00> : vector<16xf32>
    %14 = vector.multi_reduction <add>, %13, %cst_13 [1] : vector<16x2xf32> to vector<16xf32>
    %15 = vector.shape_cast %14 : vector<16xf32> to vector<16x1xf32>
    %16 = vector.broadcast %15 : vector<16x1xf32> to vector<16x8xf32>
    %17 = arith.mulf %11, %16 : vector<16x8xf32>
    %cst_14 = arith.constant dense<0.000000e+00> : vector<8xf32>
    %18 = vector.multi_reduction <add>, %17, %cst_14 [0] : vector<16x8xf32> to vector<8xf32>
    %19 = vector.shape_cast %18 : vector<8xf32> to vector<1x8xf32>
    %c0_15 = arith.constant 0 : index
    %c0_16 = arith.constant 0 : index
    %c0_17 = arith.constant 0 : index
    %20 = vector.load %arg7[%c0_15, %c0_16, %c0_17] : memref<1x1x8xf32, #tpu.memory_space<vmem>>, vector<1x1x8xf32>
    %21 = vector.shape_cast %20 : vector<1x1x8xf32> to vector<1x8xf32>
    %22 = vector.shape_cast %19 : vector<1x8xf32> to vector<1x1x8xf32>
    tpu.vector_store %arg7[%c0_15, %c0_16, %c0_17], %22 {strides = array<i32>} : memref<1x1x8xf32, #tpu.memory_space<vmem>>, vector<1x1x8xf32>,
    %23 = arith.mulf %17, %17 : vector<16x8xf32>
    %cst_18 = arith.constant dense<0.000000e+00> : vector<8xf32>
    %24 = vector.multi_reduction <add>, %23, %cst_18 [0] : vector<16x8xf32> to vector<8xf32>
    %25 = vector.shape_cast %24 : vector<8xf32> to vector<1x8xf32>
    %c0_19 = arith.constant 0 : index
    %c0_20 = arith.constant 0 : index
    %c0_21 = arith.constant 0 : index
    %26 = vector.load %arg8[%c0_19, %c0_20, %c0_21] : memref<1x1x8xf32, #tpu.memory_space<vmem>>, vector<1x1x8xf32>
    %27 = vector.shape_cast %26 : vector<1x1x8xf32> to vector<1x8xf32>
    %28 = vector.shape_cast %25 : vector<1x8xf32> to vector<1x1x8xf32>
    tpu.vector_store %arg8[%c0_19, %c0_20, %c0_21], %28 {strides = array<i32>} : memref<1x1x8xf32, #tpu.memory_space<vmem>>, vector<1x1x8xf32>,
    return
  }
  func.func @transform_0(%arg0: i32) -> (i32, i32) {
    %c0_i32 = arith.constant 0 : i32
    %c0_i32_0 = arith.constant 0 : i32
    return %arg0, %c0_i32 : i32, i32
  }
  func.func @transform_1(%arg0: i32) -> (i32, i32) {
    %c0_i32 = arith.constant 0 : i32
    %c0_i32_0 = arith.constant 0 : i32
    return %arg0, %c0_i32 : i32, i32
  }
  func.func @transform_2(%arg0: i32) -> (i32, i32) {
    %c0_i32 = arith.constant 0 : i32
    %c0_i32_0 = arith.constant 0 : i32
    %c0_i32_1 = arith.constant 0 : i32
    return %c0_i32, %c0_i32_0 : i32, i32
  }
  func.func @transform_3(%arg0: i32) -> (i32, i32) {
    %c0_i32 = arith.constant 0 : i32
    %c0_i32_0 = arith.constant 0 : i32
    %c0_i32_1 = arith.constant 0 : i32
    return %c0_i32, %c0_i32_0 : i32, i32
  }
  func.func @transform_4(%arg0: i32) -> (i32, i32) {
    %c0_i32 = arith.constant 0 : i32
    %c0_i32_0 = arith.constant 0 : i32
    %c0_i32_1 = arith.constant 0 : i32
    return %c0_i32, %c0_i32_0 : i32, i32
  }
  func.func @transform_5(%arg0: i32) -> (i32, i32) {
    %c0_i32 = arith.constant 0 : i32
    %c0_i32_0 = arith.constant 0 : i32
    return %arg0, %c0_i32 : i32, i32
  }
  func.func @transform_6(%arg0: i32) -> (i32, i32, i32) {
    %c0_i32 = arith.constant 0 : i32
    %c0_i32_0 = arith.constant 0 : i32
    %c0_i32_1 = arith.constant 0 : i32
    return %arg0, %c0_i32, %c0_i32_0 : i32, i32, i32
  }
  func.func @transform_7(%arg0: i32) -> (i32, i32, i32) {
    %c0_i32 = arith.constant 0 : i32
    %c0_i32_0 = arith.constant 0 : i32
    %c0_i32_1 = arith.constant 0 : i32
    return %arg0, %c0_i32, %c0_i32_0 : i32, i32, i32
  }
}

module attributes {stable_mosaic.version = 11 : i64} {
  func.func @attn_node_kernel(%arg0: i32, %arg1: memref<16x8xf32, #tpu.memory_space<vmem>>, %arg2: memref<8x512xbf16, #tpu.memory_space<vmem>>, %arg3: memref<1x512xf32, #tpu.memory_space<vmem>>, %arg4: memref<4x128x128xbf16, #tpu.memory_space<vmem>>, %arg5: memref<16x512xbf16, #tpu.memory_space<vmem>>, %arg6: memref<16x512xbf16, #tpu.memory_space<vmem>>) attributes {dimension_semantics = [#tpu.dimension_semantics<parallel>], iteration_bounds = array<i64: 1>, scalar_prefetch = 0 : i64, scratch_operands = 0 : i64, tpu.core_type = #tpu.core_type<tc>, window_params = [{transform_indices = @transform_0, window_bounds = array<i64: 16, 8>}, {pipeline_mode = #tpu.pipeline_mode<synchronous>, transform_indices = @transform_1, window_bounds = array<i64: 8, 512>}, {pipeline_mode = #tpu.pipeline_mode<synchronous>, transform_indices = @transform_2, window_bounds = array<i64: 1, 512>}, {pipeline_mode = #tpu.pipeline_mode<synchronous>, transform_indices = @transform_3, window_bounds = array<i64: 4, 128, 128>}, {transform_indices = @transform_4, window_bounds = array<i64: 16, 512>}, {transform_indices = @transform_5, window_bounds = array<i64: 16, 512>}]} {
    %c0 = arith.constant 0 : index
    %c0_0 = arith.constant 0 : index
    %0 = vector.load %arg1[%c0, %c0_0] : memref<16x8xf32, #tpu.memory_space<vmem>>, vector<16x8xf32>
    %1 = arith.truncf %0 : vector<16x8xf32> to vector<16x8xbf16>
    %c0_1 = arith.constant 0 : index
    %c0_2 = arith.constant 0 : index
    %2 = vector.load %arg2[%c0_1, %c0_2] : memref<8x512xbf16, #tpu.memory_space<vmem>>, vector<8x512xbf16>
    %cst = arith.constant dense<0.000000e+00> : vector<16x512xf32>
    %3 = tpu.matmul %1, %2, %cst {dimension_numbers = #tpu.dot_dimension_numbers<[1], [0], [0], [1], [0, 0, 1, 1], [], []>} : vector<16x8xbf16>, vector<8x512xbf16>, vector<16x512xf32> -> vector<16x512xf32>
    %c0_3 = arith.constant 0 : index
    %c0_4 = arith.constant 0 : index
    %4 = vector.load %arg3[%c0_3, %c0_4] : memref<1x512xf32, #tpu.memory_space<vmem>>, vector<1x512xf32>
    %5 = vector.broadcast %4 : vector<1x512xf32> to vector<16x512xf32>
    %6 = arith.addf %3, %5 : vector<16x512xf32>
    %7 = arith.truncf %6 : vector<16x512xf32> to vector<16x512xbf16>
    %c0_5 = arith.constant 0 : index
    %c0_6 = arith.constant 0 : index
    %8 = vector.load %arg5[%c0_5, %c0_6] : memref<16x512xbf16, #tpu.memory_space<vmem>>, vector<16x512xbf16>
    tpu.vector_store %arg5[%c0_5, %c0_6], %7 {strides = array<i32>} : memref<16x512xbf16, #tpu.memory_space<vmem>>, vector<16x512xbf16>,
    %9 = vector.extract_strided_slice %7 {offsets = [0, 0], sizes = [16, 128], strides = [1, 1]} : vector<16x512xbf16> to vector<16x128xbf16>
    %c0_7 = arith.constant 0 : index
    %c0_8 = arith.constant 0 : index
    %c0_9 = arith.constant 0 : index
    %10 = vector.load %arg4[%c0_7, %c0_8, %c0_9] : memref<4x128x128xbf16, #tpu.memory_space<vmem>>, vector<1x128x128xbf16>
    %11 = vector.shape_cast %10 : vector<1x128x128xbf16> to vector<128x128xbf16>
    %cst_10 = arith.constant dense<0.000000e+00> : vector<16x128xf32>
    %12 = tpu.matmul %9, %11, %cst_10 {dimension_numbers = #tpu.dot_dimension_numbers<[1], [0], [0], [1], [0, 0, 1, 1], [], []>} : vector<16x128xbf16>, vector<128x128xbf16>, vector<16x128xf32> -> vector<16x128xf32>
    %13 = arith.truncf %12 : vector<16x128xf32> to vector<16x128xbf16>
    %c0_11 = arith.constant 0 : index
    %c0_12 = arith.constant 0 : index
    %14 = vector.load %arg6[%c0_11, %c0_12] : memref<16x512xbf16, #tpu.memory_space<vmem>>, vector<16x128xbf16>
    tpu.vector_store %arg6[%c0_11, %c0_12], %13 {strides = array<i32>} : memref<16x512xbf16, #tpu.memory_space<vmem>>, vector<16x128xbf16>,
    %15 = vector.extract_strided_slice %7 {offsets = [0, 128], sizes = [16, 128], strides = [1, 1]} : vector<16x512xbf16> to vector<16x128xbf16>
    %c1 = arith.constant 1 : index
    %c0_13 = arith.constant 0 : index
    %c0_14 = arith.constant 0 : index
    %16 = vector.load %arg4[%c1, %c0_13, %c0_14] : memref<4x128x128xbf16, #tpu.memory_space<vmem>>, vector<1x128x128xbf16>
    %17 = vector.shape_cast %16 : vector<1x128x128xbf16> to vector<128x128xbf16>
    %cst_15 = arith.constant dense<0.000000e+00> : vector<16x128xf32>
    %18 = tpu.matmul %15, %17, %cst_15 {dimension_numbers = #tpu.dot_dimension_numbers<[1], [0], [0], [1], [0, 0, 1, 1], [], []>} : vector<16x128xbf16>, vector<128x128xbf16>, vector<16x128xf32> -> vector<16x128xf32>
    %19 = arith.truncf %18 : vector<16x128xf32> to vector<16x128xbf16>
    %c0_16 = arith.constant 0 : index
    %c128 = arith.constant 128 : index
    %20 = vector.load %arg6[%c0_16, %c128] : memref<16x512xbf16, #tpu.memory_space<vmem>>, vector<16x128xbf16>
    tpu.vector_store %arg6[%c0_16, %c128], %19 {strides = array<i32>} : memref<16x512xbf16, #tpu.memory_space<vmem>>, vector<16x128xbf16>,
    %21 = vector.extract_strided_slice %7 {offsets = [0, 256], sizes = [16, 128], strides = [1, 1]} : vector<16x512xbf16> to vector<16x128xbf16>
    %c2 = arith.constant 2 : index
    %c0_17 = arith.constant 0 : index
    %c0_18 = arith.constant 0 : index
    %22 = vector.load %arg4[%c2, %c0_17, %c0_18] : memref<4x128x128xbf16, #tpu.memory_space<vmem>>, vector<1x128x128xbf16>
    %23 = vector.shape_cast %22 : vector<1x128x128xbf16> to vector<128x128xbf16>
    %cst_19 = arith.constant dense<0.000000e+00> : vector<16x128xf32>
    %24 = tpu.matmul %21, %23, %cst_19 {dimension_numbers = #tpu.dot_dimension_numbers<[1], [0], [0], [1], [0, 0, 1, 1], [], []>} : vector<16x128xbf16>, vector<128x128xbf16>, vector<16x128xf32> -> vector<16x128xf32>
    %25 = arith.truncf %24 : vector<16x128xf32> to vector<16x128xbf16>
    %c0_20 = arith.constant 0 : index
    %c256 = arith.constant 256 : index
    %26 = vector.load %arg6[%c0_20, %c256] : memref<16x512xbf16, #tpu.memory_space<vmem>>, vector<16x128xbf16>
    tpu.vector_store %arg6[%c0_20, %c256], %25 {strides = array<i32>} : memref<16x512xbf16, #tpu.memory_space<vmem>>, vector<16x128xbf16>,
    %27 = vector.extract_strided_slice %7 {offsets = [0, 384], sizes = [16, 128], strides = [1, 1]} : vector<16x512xbf16> to vector<16x128xbf16>
    %c3 = arith.constant 3 : index
    %c0_21 = arith.constant 0 : index
    %c0_22 = arith.constant 0 : index
    %28 = vector.load %arg4[%c3, %c0_21, %c0_22] : memref<4x128x128xbf16, #tpu.memory_space<vmem>>, vector<1x128x128xbf16>
    %29 = vector.shape_cast %28 : vector<1x128x128xbf16> to vector<128x128xbf16>
    %cst_23 = arith.constant dense<0.000000e+00> : vector<16x128xf32>
    %30 = tpu.matmul %27, %29, %cst_23 {dimension_numbers = #tpu.dot_dimension_numbers<[1], [0], [0], [1], [0, 0, 1, 1], [], []>} : vector<16x128xbf16>, vector<128x128xbf16>, vector<16x128xf32> -> vector<16x128xf32>
    %31 = arith.truncf %30 : vector<16x128xf32> to vector<16x128xbf16>
    %c0_24 = arith.constant 0 : index
    %c384 = arith.constant 384 : index
    %32 = vector.load %arg6[%c0_24, %c384] : memref<16x512xbf16, #tpu.memory_space<vmem>>, vector<16x128xbf16>
    tpu.vector_store %arg6[%c0_24, %c384], %31 {strides = array<i32>} : memref<16x512xbf16, #tpu.memory_space<vmem>>, vector<16x128xbf16>,
    return
  }
  func.func @transform_0(%arg0: i32) -> (i32, i32) {
    %c0_i32 = arith.constant 0 : i32
    %c0_i32_0 = arith.constant 0 : i32
    return %arg0, %c0_i32 : i32, i32
  }
  func.func @transform_1(%arg0: i32) -> (i32, i32) {
    %c0_i32 = arith.constant 0 : i32
    %c0_i32_0 = arith.constant 0 : i32
    %c0_i32_1 = arith.constant 0 : i32
    return %c0_i32, %c0_i32_0 : i32, i32
  }
  func.func @transform_2(%arg0: i32) -> (i32, i32) {
    %c0_i32 = arith.constant 0 : i32
    %c0_i32_0 = arith.constant 0 : i32
    %c0_i32_1 = arith.constant 0 : i32
    return %c0_i32, %c0_i32_0 : i32, i32
  }
  func.func @transform_3(%arg0: i32) -> (i32, i32, i32) {
    %c0_i32 = arith.constant 0 : i32
    %c0_i32_0 = arith.constant 0 : i32
    %c0_i32_1 = arith.constant 0 : i32
    %c0_i32_2 = arith.constant 0 : i32
    return %c0_i32, %c0_i32_0, %c0_i32_1 : i32, i32, i32
  }
  func.func @transform_4(%arg0: i32) -> (i32, i32) {
    %c0_i32 = arith.constant 0 : i32
    %c0_i32_0 = arith.constant 0 : i32
    return %arg0, %c0_i32 : i32, i32
  }
  func.func @transform_5(%arg0: i32) -> (i32, i32) {
    %c0_i32 = arith.constant 0 : i32
    %c0_i32_0 = arith.constant 0 : i32
    return %arg0, %c0_i32 : i32, i32
  }
}

module attributes {stable_mosaic.version = 11 : i64} {
  func.func @edge_score_kernel(%arg0: i32, %arg1: memref<1x128x512xbf16, #tpu.memory_space<vmem>>, %arg2: memref<1x128x512xbf16, #tpu.memory_space<vmem>>, %arg3: memref<1x128xf32, #tpu.memory_space<vmem>>) attributes {dimension_semantics = [#tpu.dimension_semantics<parallel>], iteration_bounds = array<i64: 1>, scalar_prefetch = 0 : i64, scratch_operands = 0 : i64, tpu.core_type = #tpu.core_type<tc>, window_params = [{transform_indices = @transform_0, window_bounds = array<i64: 1, 128, 512>}, {transform_indices = @transform_1, window_bounds = array<i64: 1, 128, 512>}, {transform_indices = @transform_2, window_bounds = array<i64: 1, 128>}]} {
    %c0 = arith.constant 0 : index
    %c0_0 = arith.constant 0 : index
    %c0_1 = arith.constant 0 : index
    %0 = vector.load %arg1[%c0, %c0_0, %c0_1] : memref<1x128x512xbf16, #tpu.memory_space<vmem>>, vector<1x128x512xbf16>
    %1 = arith.extf %0 : vector<1x128x512xbf16> to vector<1x128x512xf32>
    %c0_2 = arith.constant 0 : index
    %c0_3 = arith.constant 0 : index
    %c0_4 = arith.constant 0 : index
    %2 = vector.load %arg2[%c0_2, %c0_3, %c0_4] : memref<1x128x512xbf16, #tpu.memory_space<vmem>>, vector<1x128x512xbf16>
    %3 = arith.extf %2 : vector<1x128x512xbf16> to vector<1x128x512xf32>
    %4 = arith.mulf %1, %3 : vector<1x128x512xf32>
    %cst = arith.constant dense<0.000000e+00> : vector<1x128xf32>
    %5 = vector.multi_reduction <add>, %4, %cst [2] : vector<1x128x512xf32> to vector<1x128xf32>
    %cst_5 = arith.constant 2.500000e-01 : f32
    %6 = vector.broadcast %cst_5 : f32 to vector<1x128xf32>
    %7 = arith.mulf %5, %6 : vector<1x128xf32>
    %c0_6 = arith.constant 0 : index
    %c0_7 = arith.constant 0 : index
    %8 = vector.load %arg3[%c0_6, %c0_7] : memref<1x128xf32, #tpu.memory_space<vmem>>, vector<1x128xf32>
    tpu.vector_store %arg3[%c0_6, %c0_7], %7 {strides = array<i32>} : memref<1x128xf32, #tpu.memory_space<vmem>>, vector<1x128xf32>,
    return
  }
  func.func @transform_0(%arg0: i32) -> (i32, i32, i32) {
    %c0_i32 = arith.constant 0 : i32
    %c0_i32_0 = arith.constant 0 : i32
    %c0_i32_1 = arith.constant 0 : i32
    return %arg0, %c0_i32, %c0_i32_0 : i32, i32, i32
  }
  func.func @transform_1(%arg0: i32) -> (i32, i32, i32) {
    %c0_i32 = arith.constant 0 : i32
    %c0_i32_0 = arith.constant 0 : i32
    %c0_i32_1 = arith.constant 0 : i32
    return %arg0, %c0_i32, %c0_i32_0 : i32, i32, i32
  }
  func.func @transform_2(%arg0: i32) -> (i32, i32) {
    %c0_i32 = arith.constant 0 : i32
    %c0_i32_0 = arith.constant 0 : i32
    return %arg0, %c0_i32 : i32, i32
  }
}

</mosaic_0001>

<llo_original>
// kernel: _togl_forward_impl.9
$region0: #{_togl_forward_impl.9}
  #allocation0 [shape = 'u32[]', space=smem, size = 0x4, offset = 0x4, fixed_abs, tag = 'smem constant byte address 0x4 - core index']
  #allocation1 [shape = 'u32[144,128]{1,0:T(1,128)}', space=vmem, size = 0x12000, scoped, tag = 'internal scratch']
  %s0 = inlined_call_operand.vmem [shape: f32[16,8], index: 0, kind: input, shape index: {}]
  %s1 = inlined_call_operand.vmem [shape: f32[16,8], index: 1, kind: input, shape index: {}]
  %s2 = inlined_call_operand.vmem [shape: f32[1,8], index: 2, kind: input, shape index: {}]
  %s3 = inlined_call_operand.vmem [shape: f32[1,8], index: 3, kind: input, shape index: {}]
  %s4 = inlined_call_operand.vmem [shape: f32[16,8], index: 4, kind: output, shape index: {}]
  %s5 = sld [smem:[#allocation0]]
  $region26: #{_togl_forward_impl.9} parent=0
    _
  %s7 = ssub.s32 1, %s5
  %s8 = scalar_select 0, %s7, %s5
  // Predicated region
  $region2: #{_togl_forward_impl.9} parent=0 // pred_check
    _
  $region3: #{_togl_forward_impl.9} parent=0 // pred_check_branch
    %10 = sbr.rel (0) target = $region5
  $region4: #{_togl_forward_impl.9} parent=0 // pred_region
    _
  $region5: #{_togl_forward_impl.9} parent=0 // pred_fallthru
    _
  // Predicated region
  $region6: #{_togl_forward_impl.9} parent=0 // pred_check
    _
  $region7: #{_togl_forward_impl.9} parent=0 // pred_check_branch
    %12 = sbr.rel (0) target = $region9
  $region8: #{_togl_forward_impl.9} parent=0 // pred_region
    _
  $region9: #{_togl_forward_impl.9} parent=0 // pred_fallthru
    _
  // Predicated region
  $region10: #{_togl_forward_impl.9} parent=0 // pred_check
    _
  $region11: #{_togl_forward_impl.9} parent=0 // pred_check_branch
    %14 = sbr.rel (0) target = $region13
  $region12: #{_togl_forward_impl.9} parent=0 // pred_region
    _
  $region13: #{_togl_forward_impl.9} parent=0 // pred_fallthru
    _
  // Predicated region
  $region14: #{_togl_forward_impl.9} parent=0 // pred_check
    _
  $region15: #{_togl_forward_impl.9} parent=0 // pred_check_branch
    %16 = sbr.rel (0) target = $region17
  $region16: #{_togl_forward_impl.9} parent=0 // pred_region
    _
  $region17: #{_togl_forward_impl.9} parent=0 // pred_fallthru
    _
  %v17 = vld [vmem:[%s0] sm:$0xff]
  %v18 = vld [vmem:[%s0 + $0x8] sm:$0xff]
  %v19 = vld [vmem:[%s1] sm:$0xff]
  %v20 = vld [vmem:[%s1 + $0x8] sm:$0xff]
  %v21 = vld [vmem:[%s2] sm:$0x1]
  %v23 = vlaneseq
  %v24 = vshrl.u32 %v23, 7
  %v25 = vsub.s32 0, %v24
  %v26 = vrot.slane %v21, %v25
  %v28 = vmul.f32 %v19, %v26
  %v29 = vmul.f32 %v20, %v26
  %v30 = vadd.f32 %v17, %v28
  %v31 = vadd.f32 %v18, %v29
  %v32 = vld [vmem:[%s3] sm:$0x1]
  %v34 = vlaneseq
  %v35 = vshrl.u32 %v34, 7
  %v36 = vsub.s32 0, %v35
  %v37 = vrot.slane %v32, %v36
  %v39 = vadd.f32 %v30, %v37
  %v40 = vadd.f32 %v31, %v37
  %vm41 = vcmask 64512
  %42 = vst.msk [vmem:[%s4] sm:$0xff] %vm41, %v39
  %43 = vst.msk [vmem:[%s4 + $0x8] sm:$0xff] %vm41, %v40
  // Predicated region
  $region18: #{_togl_forward_impl.9} parent=0 // pred_check
    _
  $region19: #{_togl_forward_impl.9} parent=0 // pred_check_branch
    %45 = sbr.rel (0) target = $region21
  $region20: #{_togl_forward_impl.9} parent=0 // pred_region
    _
  $region21: #{_togl_forward_impl.9} parent=0 // pred_fallthru
    _
  // Predicated region
  $region22: #{_togl_forward_impl.9} parent=0 // pred_check
    _
  $region23: #{_togl_forward_impl.9} parent=0 // pred_check_branch
    %47 = sbr.rel (0) target = $region25
  $region24: #{_togl_forward_impl.9} parent=0 // pred_region
    _
  $region25: #{_togl_forward_impl.9} parent=0 // pred_fallthru
    _

// kernel: _togl_forward_impl.7
$region0: #{_togl_forward_impl.7}
  #allocation0 [shape = 'u32[]', space=smem, size = 0x4, offset = 0x4, fixed_abs, tag = 'smem constant byte address 0x4 - core index']
  #allocation1 [shape = 'u32[144,128]{1,0:T(1,128)}', space=vmem, size = 0x12000, scoped, tag = 'internal scratch']
  %s0 = inlined_call_operand.vmem [shape: bf16[16,16], index: 0, kind: input, shape index: {}]
  %s1 = inlined_call_operand.vmem [shape: bf16[16,2], index: 1, kind: input, shape index: {}]
  %s2 = inlined_call_operand.vmem [shape: bf16[2,16], index: 2, kind: input, shape index: {}]
  %s3 = inlined_call_operand.vmem [shape: bf16[2,16], index: 3, kind: input, shape index: {}]
  %s4 = inlined_call_operand.vmem [shape: bf16[16,16], index: 4, kind: input, shape index: {}]
  %s5 = inlined_call_operand.vmem [shape: f32[1,16], index: 5, kind: input, shape index: {}]
  %s6 = inlined_call_operand.vmem [shape: bf16[16,16], index: 6, kind: output, shape index: {0}]
  %s7 = inlined_call_operand.vmem [shape: f32[1,2,16], index: 7, kind: output, shape index: {1}]
  %8 = xla_tuple %s6, %s7
  %s9 = sld [smem:[#allocation0]]
  $region42: #{_togl_forward_impl.7} parent=0
    _
  %s11 = ssub.s32 1, %s9
  %s12 = scalar_select 0, %s11, %s9
  // Predicated region
  $region2: #{_togl_forward_impl.7} parent=0 // pred_check
    _
  $region3: #{_togl_forward_impl.7} parent=0 // pred_check_branch
    %14 = sbr.rel (0) target = $region5
  $region4: #{_togl_forward_impl.7} parent=0 // pred_region
    _
  $region5: #{_togl_forward_impl.7} parent=0 // pred_fallthru
    _
  // Predicated region
  $region6: #{_togl_forward_impl.7} parent=0 // pred_check
    _
  $region7: #{_togl_forward_impl.7} parent=0 // pred_check_branch
    %16 = sbr.rel (0) target = $region9
  $region8: #{_togl_forward_impl.7} parent=0 // pred_region
    _
  $region9: #{_togl_forward_impl.7} parent=0 // pred_fallthru
    _
  // Predicated region
  $region10: #{_togl_forward_impl.7} parent=0 // pred_check
    _
  $region11: #{_togl_forward_impl.7} parent=0 // pred_check_branch
    %18 = sbr.rel (0) target = $region13
  $region12: #{_togl_forward_impl.7} parent=0 // pred_region
    _
  $region13: #{_togl_forward_impl.7} parent=0 // pred_fallthru
    _
  // Predicated region
  $region14: #{_togl_forward_impl.7} parent=0 // pred_check
    _
  $region15: #{_togl_forward_impl.7} parent=0 // pred_check_branch
    %20 = sbr.rel (0) target = $region17
  $region16: #{_togl_forward_impl.7} parent=0 // pred_region
    _
  $region17: #{_togl_forward_impl.7} parent=0 // pred_fallthru
    _
  // Predicated region
  $region18: #{_togl_forward_impl.7} parent=0 // pred_check
    _
  $region19: #{_togl_forward_impl.7} parent=0 // pred_check_branch
    %22 = sbr.rel (0) target = $region21
  $region20: #{_togl_forward_impl.7} parent=0 // pred_region
    _
  $region21: #{_togl_forward_impl.7} parent=0 // pred_fallthru
    _
  // Predicated region
  $region22: #{_togl_forward_impl.7} parent=0 // pred_check
    _
  $region23: #{_togl_forward_impl.7} parent=0 // pred_check_branch
    %24 = sbr.rel (0) target = $region25
  $region24: #{_togl_forward_impl.7} parent=0 // pred_region
    _
  $region25: #{_togl_forward_impl.7} parent=0 // pred_fallthru
    _
  %v26 = vld [vmem:[%s0] sm:$0xf]
  %v27 = vld [vmem:[%s0 + $0x4] sm:$0xf]
  %v28 = vld [vmem:[%s4] sm:$0xf]
  %v29 = vld [vmem:[%s4 + $0x4] sm:$0xf]
  %v30 = vld [vmem:[%s5] sm:$0x1]
  %v32 = vlaneseq
  %v33 = vshrl.u32 %v32, 7
  %v34 = vsub.s32 0, %v33
  %v35 = vrot.slane %v30, %v34
  %v39 = vunpack.c.l.b16 %v26
  %v40 = vunpack.c.l.b16 %v27
  %v41 = vpack.c.b16 %v40, %v39
  %v44 = vunpack.c.l.b16 %v28
  %v45 = vunpack.c.l.b16 %v29
  %v46 = vpack.c.b16 %v45, %v44
  %vm48 = vcmask 130048
  %v50 = vsel %vm48, %v41, 0
  %52 = vmatprep.subr.bf16.mxu0 0
  %53 = vmatpush1.bf16.msra.mxu0 0
  %54 = vmatprep.subr.bf16.mxu0 0
  %55 = vmatpush1.bf16.msra.mxu0 0
  %56 = vmatprep.subr.bf16.mxu0 0
  %57 = vmatpush1.bf16.msra.mxu0 0
  %58 = vmatprep.subr.bf16.mxu0 0
  %59 = vmatpush1.bf16.msra.mxu0 0
  %60 = vmatprep.subr.bf16.mxu0 0
  %61 = vmatpush1.bf16.msra.mxu0 0
  %62 = vmatprep.subr.bf16.mxu0 0
  %63 = vmatpush1.bf16.msra.mxu0 0
  %64 = vmatprep.subr.bf16.mxu0 0
  %65 = vmatpush1.bf16.msra.mxu0 0
  %66 = vmatprep.subr.bf16.mxu0 0
  %67 = vmatpush1.bf16.msra.mxu0 %v46
  %68 = vmatprep.subr.bf16.mxu0 0
  %69 = vmatpush2.bf16.msra.mxu0 0
  %70 = vmatprep.subr.bf16.mxu0 0
  %71 = vmatpush2.bf16.msra.mxu0 0
  %72 = vmatprep.subr.bf16.mxu0 0
  %73 = vmatpush2.bf16.msra.mxu0 0
  %74 = vmatprep.subr.bf16.mxu0 0
  %75 = vmatpush2.bf16.msra.mxu0 0
  %76 = vmatprep.subr.bf16.mxu0 0
  %77 = vmatpush2.bf16.msra.mxu0 0
  %78 = vmatprep.subr.bf16.mxu0 0
  %79 = vmatpush2.bf16.msra.mxu0 0
  %80 = vmatprep.subr.bf16.mxu0 0
  %81 = vmatpush2.bf16.msra.mxu0 0
  %82 = vmatprep.subr.bf16.mxu0 0
  %83 = vmatpush2.bf16.msra.mxu0 0
  %84 = vmatprep.mubr.bf16.mxu0 0
  %85 = vmatmul.mubr.bf16.gmra.mxu0 %v50
  %v86 = vpop.f32.mrf.mxu0
  %v87 = vadd.f32 %v35, %v86
  %v88 = vpop.f32.mrf.mxu0
  %v89 = vpop.f32.mrf.mxu0
  %v90 = vadd.f32 %v35, %v89
  %v91 = vpop.f32.mrf.mxu0
  %92 = vdwg.mxu0
  %v93 = vld [vmem:[%s1] sm:$0xf]
  %v94 = vld [vmem:[%s1 + $0x4] sm:$0xf]
  %v95 = vld [vmem:[%s3] sm:$0x1]
  %v98 = vunpack.c.l.b16 %v93
  %v99 = vunpack.c.l.b16 %v94
  %v100 = vpack.c.b16 %v99, %v98
  %vm101 = vcmask 15360
  %v103 = vsel %vm101, %v100, 0
  %vm105 = vcmask 1040384
  %v107 = vsel %vm105, %v95, 0
  %109 = vmatprep.subr.bf16.mxu0 0
  %110 = vmatpush1.bf16.msra.mxu0 0
  %111 = vmatprep.subr.bf16.mxu0 0
  %112 = vmatpush1.bf16.msra.mxu0 0
  %113 = vmatprep.subr.bf16.mxu0 0
  %114 = vmatpush1.bf16.msra.mxu0 0
  %115 = vmatprep.subr.bf16.mxu0 0
  %116 = vmatpush1.bf16.msra.mxu0 0
  %117 = vmatprep.subr.bf16.mxu0 0
  %118 = vmatpush1.bf16.msra.mxu0 0
  %119 = vmatprep.subr.bf16.mxu0 0
  %120 = vmatpush1.bf16.msra.mxu0 0
  %121 = vmatprep.subr.bf16.mxu0 0
  %122 = vmatpush1.bf16.msra.mxu0 0
  %123 = vmatprep.subr.bf16.mxu0 0
  %124 = vmatpush1.bf16.msra.mxu0 %v107
  %125 = vmatprep.subr.bf16.mxu0 0
  %126 = vmatpush2.bf16.msra.mxu0 0
  %127 = vmatprep.subr.bf16.mxu0 0
  %128 = vmatpush2.bf16.msra.mxu0 0
  %129 = vmatprep.subr.bf16.mxu0 0
  %130 = vmatpush2.bf16.msra.mxu0 0
  %131 = vmatprep.subr.bf16.mxu0 0
  %132 = vmatpush2.bf16.msra.mxu0 0
  %133 = vmatprep.subr.bf16.mxu0 0
  %134 = vmatpush2.bf16.msra.mxu0 0
  %135 = vmatprep.subr.bf16.mxu0 0
  %136 = vmatpush2.bf16.msra.mxu0 0
  %137 = vmatprep.subr.bf16.mxu0 0
  %138 = vmatpush2.bf16.msra.mxu0 0
  %139 = vmatprep.subr.bf16.mxu0 0
  %140 = vmatpush2.bf16.msra.mxu0 0
  %141 = vmatprep.mubr.bf16.mxu0 0
  %142 = vmatmul.mubr.bf16.gmra.mxu0 %v103
  %v143 = vpop.f32.mrf.mxu0
  %v144 = vadd.f32 0.0, %v143
  %v145 = vpop.f32.mrf.mxu0
  %v146 = vpop.f32.mrf.mxu0
  %v147 = vadd.f32 0.0, %v146
  %v148 = vpop.f32.mrf.mxu0
  %149 = vdwg.mxu0
  %v150 = vsub.f32 %v87, %v144
  %v151 = vsub.f32 %v90, %v147
  %v152 = vmax.f32 %v150, 0.0
  %v153 = vmax.f32 %v151, 0.0
  %v154 = vpack.c.bf16 %v153, %v152
  %v156 = vunpack.c.l.b16 %v154
  %v157 = vunpack.c.h.b16 %v154
  %v158 = vpack.c.b16 %v156, %v156
  %v159 = vpack.c.b16 %v157, %v157
  %vm162 = vcmask 125952
  %163 = vst.msk [vmem:[%s6] sm:$0xf] %vm162, %v158
  %164 = vst.msk [vmem:[%s6 + $0x4] sm:$0xf] %vm162, %v159
  %v165 = vld [vmem:[%s2] sm:$0x1]
  %v167 = vsel %vm48, %v165, 0
  %169 = vmatprep.subr.bf16.mxu0 0
  %170 = vmatpush1.bf16.msra.mxu0 0
  %171 = vmatprep.subr.bf16.mxu0 0
  %172 = vmatpush1.bf16.msra.mxu0 0
  %173 = vmatprep.subr.bf16.mxu0 0
  %174 = vmatpush1.bf16.msra.mxu0 0
  %175 = vmatprep.subr.bf16.mxu0 0
  %176 = vmatpush1.bf16.msra.mxu0 0
  %177 = vmatprep.subr.bf16.mxu0 0
  %178 = vmatpush1.bf16.msra.mxu0 0
  %179 = vmatprep.subr.bf16.mxu0 0
  %180 = vmatpush1.bf16.msra.mxu0 0
  %181 = vmatprep.subr.bf16.mxu0 0
  %182 = vmatpush1.bf16.msra.mxu0 0
  %183 = vmatprep.subr.bf16.mxu0 0
  %184 = vmatpush1.bf16.msra.mxu0 %v154
  %185 = vmatprep.subr.bf16.mxu0 0
  %186 = vmatpush2.bf16.msra.mxu0 0
  %187 = vmatprep.subr.bf16.mxu0 0
  %188 = vmatpush2.bf16.msra.mxu0 0
  %189 = vmatprep.subr.bf16.mxu0 0
  %190 = vmatpush2.bf16.msra.mxu0 0
  %191 = vmatprep.subr.bf16.mxu0 0
  %192 = vmatpush2.bf16.msra.mxu0 0
  %193 = vmatprep.subr.bf16.mxu0 0
  %194 = vmatpush2.bf16.msra.mxu0 0
  %195 = vmatprep.subr.bf16.mxu0 0
  %196 = vmatpush2.bf16.msra.mxu0 0
  %197 = vmatprep.subr.bf16.mxu0 0
  %198 = vmatpush2.bf16.msra.mxu0 0
  %199 = vmatprep.subr.bf16.mxu0 0
  %200 = vmatpush2.bf16.msra.mxu0 0
  %201 = vmatprep.mubr.bf16.mxu0 0
  %202 = vmatmul.mubr.bf16.gmra.mxu0 %v167
  %v203 = vpop.f32.mrf.mxu0
  %v204 = vadd.f32 0.0, %v203
  %v205 = vpop.f32.mrf.mxu0
  %v206 = vpop.f32.mrf.mxu0
  %v207 = vpop.f32.mrf.mxu0
  %208 = vdwg.mxu0
  %vm209 = vcmask 123904
  %210 = vst.msk [vmem:[%s7] sm:$0x3] %vm209, %v204
  // Predicated region
  $region26: #{_togl_forward_impl.7} parent=0 // pred_check
    _
  $region27: #{_togl_forward_impl.7} parent=0 // pred_check_branch
    %212 = sbr.rel (0) target = $region29
  $region28: #{_togl_forward_impl.7} parent=0 // pred_region
    _
  $region29: #{_togl_forward_impl.7} parent=0 // pred_fallthru
    _
  // Predicated region
  $region30: #{_togl_forward_impl.7} parent=0 // pred_check
    _
  $region31: #{_togl_forward_impl.7} parent=0 // pred_check_branch
    %214 = sbr.rel (0) target = $region33
  $region32: #{_togl_forward_impl.7} parent=0 // pred_region
    _
  $region33: #{_togl_forward_impl.7} parent=0 // pred_fallthru
    _
  // Predicated region
  $region34: #{_togl_forward_impl.7} parent=0 // pred_check
    _
  $region35: #{_togl_forward_impl.7} parent=0 // pred_check_branch
    %216 = sbr.rel (0) target = $region37
  $region36: #{_togl_forward_impl.7} parent=0 // pred_region
    _
  $region37: #{_togl_forward_impl.7} parent=0 // pred_fallthru
    _
  // Predicated region
  $region38: #{_togl_forward_impl.7} parent=0 // pred_check
    _
  $region39: #{_togl_forward_impl.7} parent=0 // pred_check_branch
    %218 = sbr.rel (0) target = $region41
  $region40: #{_togl_forward_impl.7} parent=0 // pred_region
    _
  $region41: #{_togl_forward_impl.7} parent=0 // pred_fallthru
    _

// kernel: _togl_forward_impl.6
$region0: #{_togl_forward_impl.6}
  #allocation0 [shape = 'u32[]', space=smem, size = 0x4, offset = 0x4, fixed_abs, tag = 'smem constant byte address 0x4 - core index']
  #allocation1 [shape = 'u32[144,128]{1,0:T(1,128)}', space=vmem, size = 0x12000, scoped, tag = 'internal scratch']
  %s0 = inlined_call_operand.vmem [shape: f32[16,8], index: 0, kind: input, shape index: {}]
  %s1 = inlined_call_operand.vmem [shape: bf16[2,16], index: 1, kind: input, shape index: {}]
  %s2 = inlined_call_operand.vmem [shape: bf16[8,32], index: 2, kind: input, shape index: {}]
  %s3 = inlined_call_operand.vmem [shape: f32[1,32], index: 3, kind: input, shape index: {}]
  %s4 = inlined_call_operand.vmem [shape: bf16[32,16], index: 4, kind: input, shape index: {}]
  %s5 = inlined_call_operand.vmem [shape: f32[1,16], index: 5, kind: input, shape index: {}]
  %s6 = inlined_call_operand.vmem [shape: bf16[16,16], index: 6, kind: output, shape index: {0}]
  %s7 = inlined_call_operand.vmem [shape: f32[1,2,16], index: 7, kind: output, shape index: {1}]
  %8 = xla_tuple %s6, %s7
  %s9 = sld [smem:[#allocation0]]
  $region42: #{_togl_forward_impl.6} parent=0
    _
  %s11 = ssub.s32 1, %s9
  %s12 = scalar_select 0, %s11, %s9
  // Predicated region
  $region2: #{_togl_forward_impl.6} parent=0 // pred_check
    _
  $region3: #{_togl_forward_impl.6} parent=0 // pred_check_branch
    %14 = sbr.rel (0) target = $region5
  $region4: #{_togl_forward_impl.6} parent=0 // pred_region
    _
  $region5: #{_togl_forward_impl.6} parent=0 // pred_fallthru
    _
  // Predicated region
  $region6: #{_togl_forward_impl.6} parent=0 // pred_check
    _
  $region7: #{_togl_forward_impl.6} parent=0 // pred_check_branch
    %16 = sbr.rel (0) target = $region9
  $region8: #{_togl_forward_impl.6} parent=0 // pred_region
    _
  $region9: #{_togl_forward_impl.6} parent=0 // pred_fallthru
    _
  // Predicated region
  $region10: #{_togl_forward_impl.6} parent=0 // pred_check
    _
  $region11: #{_togl_forward_impl.6} parent=0 // pred_check_branch
    %18 = sbr.rel (0) target = $region13
  $region12: #{_togl_forward_impl.6} parent=0 // pred_region
    _
  $region13: #{_togl_forward_impl.6} parent=0 // pred_fallthru
    _
  // Predicated region
  $region14: #{_togl_forward_impl.6} parent=0 // pred_check
    _
  $region15: #{_togl_forward_impl.6} parent=0 // pred_check_branch
    %20 = sbr.rel (0) target = $region17
  $region16: #{_togl_forward_impl.6} parent=0 // pred_region
    _
  $region17: #{_togl_forward_impl.6} parent=0 // pred_fallthru
    _
  // Predicated region
  $region18: #{_togl_forward_impl.6} parent=0 // pred_check
    _
  $region19: #{_togl_forward_impl.6} parent=0 // pred_check_branch
    %22 = sbr.rel (0) target = $region21
  $region20: #{_togl_forward_impl.6} parent=0 // pred_region
    _
  $region21: #{_togl_forward_impl.6} parent=0 // pred_fallthru
    _
  // Predicated region
  $region22: #{_togl_forward_impl.6} parent=0 // pred_check
    _
  $region23: #{_togl_forward_impl.6} parent=0 // pred_check_branch
    %24 = sbr.rel (0) target = $region25
  $region24: #{_togl_forward_impl.6} parent=0 // pred_region
    _
  $region25: #{_togl_forward_impl.6} parent=0 // pred_fallthru
    _
  %v26 = vld [vmem:[%s0] sm:$0xff]
  %v27 = vld [vmem:[%s0 + $0x8] sm:$0xff]
  %v28 = vpack.c.bf16 %v27, %v26
  %v29 = vld [vmem:[%s2] sm:$0xf]
  %v30 = vld [vmem:[%s3] sm:$0x1]
  %v32 = vlaneseq
  %v33 = vshrl.u32 %v32, 7
  %v34 = vsub.s32 0, %v33
  %v35 = vrot.slane %v30, %v34
  %vm37 = vcmask 64512
  %v39 = vsel %vm37, %v28, 0
  %vm41 = vcmask 1043456
  %v43 = vsel %vm41, %v29, 0
  %45 = vmatprep.subr.bf16.mxu0 0
  %46 = vmatpush1.bf16.msra.mxu0 0
  %47 = vmatprep.subr.bf16.mxu0 0
  %48 = vmatpush1.bf16.msra.mxu0 0
  %49 = vmatprep.subr.bf16.mxu0 0
  %50 = vmatpush1.bf16.msra.mxu0 0
  %51 = vmatprep.subr.bf16.mxu0 0
  %52 = vmatpush1.bf16.msra.mxu0 0
  %53 = vmatprep.subr.bf16.mxu0 0
  %54 = vmatpush1.bf16.msra.mxu0 0
  %55 = vmatprep.subr.bf16.mxu0 0
  %56 = vmatpush1.bf16.msra.mxu0 0
  %57 = vmatprep.subr.bf16.mxu0 0
  %58 = vmatpush1.bf16.msra.mxu0 0
  %59 = vmatprep.subr.bf16.mxu0 0
  %60 = vmatpush1.bf16.msra.mxu0 %v43
  %61 = vmatprep.subr.bf16.mxu0 0
  %62 = vmatpush2.bf16.msra.mxu0 0
  %63 = vmatprep.subr.bf16.mxu0 0
  %64 = vmatpush2.bf16.msra.mxu0 0
  %65 = vmatprep.subr.bf16.mxu0 0
  %66 = vmatpush2.bf16.msra.mxu0 0
  %67 = vmatprep.subr.bf16.mxu0 0
  %68 = vmatpush2.bf16.msra.mxu0 0
  %69 = vmatprep.subr.bf16.mxu0 0
  %70 = vmatpush2.bf16.msra.mxu0 0
  %71 = vmatprep.subr.bf16.mxu0 0
  %72 = vmatpush2.bf16.msra.mxu0 0
  %73 = vmatprep.subr.bf16.mxu0 0
  %74 = vmatpush2.bf16.msra.mxu0 0
  %75 = vmatprep.subr.bf16.mxu0 0
  %76 = vmatpush2.bf16.msra.mxu0 0
  %77 = vmatprep.mubr.bf16.mxu0 0
  %78 = vmatmul.mubr.bf16.gmra.mxu0 %v39
  %v79 = vpop.f32.mrf.mxu0
  %v80 = vadd.f32 %v35, %v79
  %v81 = vpop.f32.mrf.mxu0
  %v82 = vpop.f32.mrf.mxu0
  %v83 = vadd.f32 %v35, %v82
  %v84 = vpop.f32.mrf.mxu0
  %85 = vdwg.mxu0
  %v86 = vmax.f32 %v80, 0.0
  %v87 = vmax.f32 %v83, 0.0
  %v88 = vpack.c.bf16 %v87, %v86
  %v89 = vld [vmem:[%s4] sm:$0xf]
  %v90 = vld [vmem:[%s4 + $0x4] sm:$0xf]
  %v91 = vld [vmem:[%s4 + $0x8] sm:$0xf]
  %v92 = vld [vmem:[%s4 + $0xc] sm:$0xf]
  %v93 = vld [vmem:[%s5] sm:$0x1]
  %v95 = vlaneseq
  %v96 = vshrl.u32 %v95, 7
  %v97 = vsub.s32 0, %v96
  %v98 = vrot.slane %v93, %v97
  %v104 = vunpack.c.l.b16 %v89
  %v105 = vunpack.c.l.b16 %v90
  %v106 = vunpack.c.l.b16 %v91
  %v107 = vunpack.c.l.b16 %v92
  %v108 = vpack.c.b16 %v105, %v104
  %v109 = vpack.c.b16 %v107, %v106
  %vm112 = vcmask 261120
  %v114 = vsel %vm112, %v88, 0
  %116 = vmatprep.subr.bf16.mxu0 0
  %117 = vmatpush1.bf16.msra.mxu0 0
  %118 = vmatprep.subr.bf16.mxu0 0
  %119 = vmatpush1.bf16.msra.mxu0 0
  %120 = vmatprep.subr.bf16.mxu0 0
  %121 = vmatpush1.bf16.msra.mxu0 0
  %122 = vmatprep.subr.bf16.mxu0 0
  %123 = vmatpush1.bf16.msra.mxu0 0
  %124 = vmatprep.subr.bf16.mxu0 0
  %125 = vmatpush1.bf16.msra.mxu0 0
  %126 = vmatprep.subr.bf16.mxu0 0
  %127 = vmatpush1.bf16.msra.mxu0 0
  %128 = vmatprep.subr.bf16.mxu0 0
  %129 = vmatpush1.bf16.msra.mxu0 %v109
  %130 = vmatprep.subr.bf16.mxu0 0
  %131 = vmatpush1.bf16.msra.mxu0 %v108
  %132 = vmatprep.subr.bf16.mxu0 0
  %133 = vmatpush2.bf16.msra.mxu0 0
  %134 = vmatprep.subr.bf16.mxu0 0
  %135 = vmatpush2.bf16.msra.mxu0 0
  %136 = vmatprep.subr.bf16.mxu0 0
  %137 = vmatpush2.bf16.msra.mxu0 0
  %138 = vmatprep.subr.bf16.mxu0 0
  %139 = vmatpush2.bf16.msra.mxu0 0
  %140 = vmatprep.subr.bf16.mxu0 0
  %141 = vmatpush2.bf16.msra.mxu0 0
  %142 = vmatprep.subr.bf16.mxu0 0
  %143 = vmatpush2.bf16.msra.mxu0 0
  %144 = vmatprep.subr.bf16.mxu0 0
  %145 = vmatpush2.bf16.msra.mxu0 0
  %146 = vmatprep.subr.bf16.mxu0 0
  %147 = vmatpush2.bf16.msra.mxu0 0
  %148 = vmatprep.mubr.bf16.mxu0 0
  %149 = vmatmul.mubr.bf16.gmra.mxu0 %v114
  %v150 = vpop.f32.mrf.mxu0
  %v151 = vadd.f32 %v98, %v150
  %v152 = vpop.f32.mrf.mxu0
  %v153 = vpop.f32.mrf.mxu0
  %v154 = vadd.f32 %v98, %v153
  %v155 = vpop.f32.mrf.mxu0
  %156 = vdwg.mxu0
  %v157 = vmax.f32 %v151, 0.0
  %v158 = vmax.f32 %v154, 0.0
  %v159 = vpack.c.bf16 %v158, %v157
  %v161 = vunpack.c.l.b16 %v159
  %v162 = vunpack.c.h.b16 %v159
  %v163 = vpack.c.b16 %v161, %v161
  %v164 = vpack.c.b16 %v162, %v162
  %vm167 = vcmask 125952
  %168 = vst.msk [vmem:[%s6] sm:$0xf] %vm167, %v163
  %169 = vst.msk [vmem:[%s6 + $0x4] sm:$0xf] %vm167, %v164
  %v170 = vld [vmem:[%s1] sm:$0x1]
  %vm171 = vcmask 130048
  %v173 = vsel %vm171, %v170, 0
  %175 = vmatprep.subr.bf16.mxu0 0
  %176 = vmatpush1.bf16.msra.mxu0 0
  %177 = vmatprep.subr.bf16.mxu0 0
  %178 = vmatpush1.bf16.msra.mxu0 0
  %179 = vmatprep.subr.bf16.mxu0 0
  %180 = vmatpush1.bf16.msra.mxu0 0
  %181 = vmatprep.subr.bf16.mxu0 0
  %182 = vmatpush1.bf16.msra.mxu0 0
  %183 = vmatprep.subr.bf16.mxu0 0
  %184 = vmatpush1.bf16.msra.mxu0 0
  %185 = vmatprep.subr.bf16.mxu0 0
  %186 = vmatpush1.bf16.msra.mxu0 0
  %187 = vmatprep.subr.bf16.mxu0 0
  %188 = vmatpush1.bf16.msra.mxu0 0
  %189 = vmatprep.subr.bf16.mxu0 0
  %190 = vmatpush1.bf16.msra.mxu0 %v159
  %191 = vmatprep.subr.bf16.mxu0 0
  %192 = vmatpush2.bf16.msra.mxu0 0
  %193 = vmatprep.subr.bf16.mxu0 0
  %194 = vmatpush2.bf16.msra.mxu0 0
  %195 = vmatprep.subr.bf16.mxu0 0
  %196 = vmatpush2.bf16.msra.mxu0 0
  %197 = vmatprep.subr.bf16.mxu0 0
  %198 = vmatpush2.bf16.msra.mxu0 0
  %199 = vmatprep.subr.bf16.mxu0 0
  %200 = vmatpush2.bf16.msra.mxu0 0
  %201 = vmatprep.subr.bf16.mxu0 0
  %202 = vmatpush2.bf16.msra.mxu0 0
  %203 = vmatprep.subr.bf16.mxu0 0
  %204 = vmatpush2.bf16.msra.mxu0 0
  %205 = vmatprep.subr.bf16.mxu0 0
  %206 = vmatpush2.bf16.msra.mxu0 0
  %207 = vmatprep.mubr.bf16.mxu0 0
  %208 = vmatmul.mubr.bf16.gmra.mxu0 %v173
  %v209 = vpop.f32.mrf.mxu0
  %v210 = vadd.f32 0.0, %v209
  %v211 = vpop.f32.mrf.mxu0
  %v212 = vpop.f32.mrf.mxu0
  %v213 = vpop.f32.mrf.mxu0
  %214 = vdwg.mxu0
  %vm215 = vcmask 123904
  %216 = vst.msk [vmem:[%s7] sm:$0x3] %vm215, %v210
  // Predicated region
  $region26: #{_togl_forward_impl.6} parent=0 // pred_check
    _
  $region27: #{_togl_forward_impl.6} parent=0 // pred_check_branch
    %218 = sbr.rel (0) target = $region29
  $region28: #{_togl_forward_impl.6} parent=0 // pred_region
    _
  $region29: #{_togl_forward_impl.6} parent=0 // pred_fallthru
    _
  // Predicated region
  $region30: #{_togl_forward_impl.6} parent=0 // pred_check
    _
  $region31: #{_togl_forward_impl.6} parent=0 // pred_check_branch
    %220 = sbr.rel (0) target = $region33
  $region32: #{_togl_forward_impl.6} parent=0 // pred_region
    _
  $region33: #{_togl_forward_impl.6} parent=0 // pred_fallthru
    _
  // Predicated region
  $region34: #{_togl_forward_impl.6} parent=0 // pred_check
    _
  $region35: #{_togl_forward_impl.6} parent=0 // pred_check_branch
    %222 = sbr.rel (0) target = $region37
  $region36: #{_togl_forward_impl.6} parent=0 // pred_region
    _
  $region37: #{_togl_forward_impl.6} parent=0 // pred_fallthru
    _
  // Predicated region
  $region38: #{_togl_forward_impl.6} parent=0 // pred_check
    _
  $region39: #{_togl_forward_impl.6} parent=0 // pred_check_branch
    %224 = sbr.rel (0) target = $region41
  $region40: #{_togl_forward_impl.6} parent=0 // pred_region
    _
  $region41: #{_togl_forward_impl.6} parent=0 // pred_fallthru
    _

// kernel: _togl_forward_impl.8
$region0: #{_togl_forward_impl.8}
  #allocation0 [shape = 'u32[]', space=smem, size = 0x4, offset = 0x4, fixed_abs, tag = 'smem constant byte address 0x4 - core index']
  #allocation1 [shape = 'u32[144,128]{1,0:T(1,128)}', space=vmem, size = 0x12000, scoped, tag = 'internal scratch']
  %s0 = inlined_call_operand.vmem [shape: bf16[16,16], index: 0, kind: input, shape index: {}]
  %s1 = inlined_call_operand.vmem [shape: bf16[16,2], index: 1, kind: input, shape index: {}]
  %s2 = inlined_call_operand.vmem [shape: bf16[2,8], index: 2, kind: input, shape index: {}]
  %s3 = inlined_call_operand.vmem [shape: bf16[16,8], index: 3, kind: input, shape index: {}]
  %s4 = inlined_call_operand.vmem [shape: f32[1,8], index: 4, kind: input, shape index: {}]
  %s5 = inlined_call_operand.vmem [shape: f32[16,8], index: 5, kind: output, shape index: {0}]
  %s6 = inlined_call_operand.vmem [shape: f32[1,1,8], index: 6, kind: output, shape index: {1}]
  %s7 = inlined_call_operand.vmem [shape: f32[1,1,8], index: 7, kind: output, shape index: {2}]
  %8 = xla_tuple %s5, %s6, %s7
  %s9 = sld [smem:[#allocation0]]
  $region46: #{_togl_forward_impl.8} parent=0
    _
  %s11 = ssub.s32 1, %s9
  %s12 = scalar_select 0, %s11, %s9
  // Predicated region
  $region2: #{_togl_forward_impl.8} parent=0 // pred_check
    _
  $region3: #{_togl_forward_impl.8} parent=0 // pred_check_branch
    %14 = sbr.rel (0) target = $region5
  $region4: #{_togl_forward_impl.8} parent=0 // pred_region
    _
  $region5: #{_togl_forward_impl.8} parent=0 // pred_fallthru
    _
  // Predicated region
  $region6: #{_togl_forward_impl.8} parent=0 // pred_check
    _
  $region7: #{_togl_forward_impl.8} parent=0 // pred_check_branch
    %16 = sbr.rel (0) target = $region9
  $region8: #{_togl_forward_impl.8} parent=0 // pred_region
    _
  $region9: #{_togl_forward_impl.8} parent=0 // pred_fallthru
    _
  // Predicated region
  $region10: #{_togl_forward_impl.8} parent=0 // pred_check
    _
  $region11: #{_togl_forward_impl.8} parent=0 // pred_check_branch
    %18 = sbr.rel (0) target = $region13
  $region12: #{_togl_forward_impl.8} parent=0 // pred_region
    _
  $region13: #{_togl_forward_impl.8} parent=0 // pred_fallthru
    _
  // Predicated region
  $region14: #{_togl_forward_impl.8} parent=0 // pred_check
    _
  $region15: #{_togl_forward_impl.8} parent=0 // pred_check_branch
    %20 = sbr.rel (0) target = $region17
  $region16: #{_togl_forward_impl.8} parent=0 // pred_region
    _
  $region17: #{_togl_forward_impl.8} parent=0 // pred_fallthru
    _
  // Predicated region
  $region18: #{_togl_forward_impl.8} parent=0 // pred_check
    _
  $region19: #{_togl_forward_impl.8} parent=0 // pred_check_branch
    %22 = sbr.rel (0) target = $region21
  $region20: #{_togl_forward_impl.8} parent=0 // pred_region
    _
  $region21: #{_togl_forward_impl.8} parent=0 // pred_fallthru
    _
  %v24 = vld [vmem:[%s1] sm:$0xf]
  %v25 = vld [vmem:[%s1 + $0x4] sm:$0xf]
  %v26 = vld [vmem:[%s0] sm:$0xf]
  %v27 = vld [vmem:[%s0 + $0x4] sm:$0xf]
  %v28 = vld [vmem:[%s3] sm:$0xf]
  %v29 = vld [vmem:[%s3 + $0x4] sm:$0xf]
  %v30 = vld [vmem:[%s4] sm:$0x1]
  %v32 = vlaneseq
  %v33 = vshrl.u32 %v32, 7
  %v34 = vsub.s32 0, %v33
  %v35 = vrot.slane %v30, %v34
  %v39 = vunpack.c.l.b16 %v26
  %v40 = vunpack.c.l.b16 %v27
  %v41 = vpack.c.b16 %v40, %v39
  %v44 = vunpack.c.l.b16 %v28
  %v45 = vunpack.c.l.b16 %v29
  %v46 = vpack.c.b16 %v45, %v44
  %vm48 = vcmask 130048
  %v50 = vsel %vm48, %v41, 0
  %52 = vmatprep.subr.bf16.mxu0 0
  %53 = vmatpush1.bf16.msra.mxu0 0
  %54 = vmatprep.subr.bf16.mxu0 0
  %55 = vmatpush1.bf16.msra.mxu0 0
  %56 = vmatprep.subr.bf16.mxu0 0
  %57 = vmatpush1.bf16.msra.mxu0 0
  %58 = vmatprep.subr.bf16.mxu0 0
  %59 = vmatpush1.bf16.msra.mxu0 0
  %60 = vmatprep.subr.bf16.mxu0 0
  %61 = vmatpush1.bf16.msra.mxu0 0
  %62 = vmatprep.subr.bf16.mxu0 0
  %63 = vmatpush1.bf16.msra.mxu0 0
  %64 = vmatprep.subr.bf16.mxu0 0
  %65 = vmatpush1.bf16.msra.mxu0 0
  %66 = vmatprep.subr.bf16.mxu0 0
  %67 = vmatpush1.bf16.msra.mxu0 %v46
  %68 = vmatprep.subr.bf16.mxu0 0
  %69 = vmatpush2.bf16.msra.mxu0 0
  %70 = vmatprep.subr.bf16.mxu0 0
  %71 = vmatpush2.bf16.msra.mxu0 0
  %72 = vmatprep.subr.bf16.mxu0 0
  %73 = vmatpush2.bf16.msra.mxu0 0
  %74 = vmatprep.subr.bf16.mxu0 0
  %75 = vmatpush2.bf16.msra.mxu0 0
  %76 = vmatprep.subr.bf16.mxu0 0
  %77 = vmatpush2.bf16.msra.mxu0 0
  %78 = vmatprep.subr.bf16.mxu0 0
  %79 = vmatpush2.bf16.msra.mxu0 0
  %80 = vmatprep.subr.bf16.mxu0 0
  %81 = vmatpush2.bf16.msra.mxu0 0
  %82 = vmatprep.subr.bf16.mxu0 0
  %83 = vmatpush2.bf16.msra.mxu0 0
  %84 = vmatprep.mubr.bf16.mxu0 0
  %85 = vmatmul.mubr.bf16.gmra.mxu0 %v50
  %v86 = vpop.f32.mrf.mxu0
  %v87 = vadd.f32 %v35, %v86
  %v88 = vpop.f32.mrf.mxu0
  %v89 = vpop.f32.mrf.mxu0
  %v90 = vadd.f32 %v35, %v89
  %v91 = vpop.f32.mrf.mxu0
  %92 = vdwg.mxu0
  %v93 = vld [vmem:[%s2] sm:$0x1]
  %v96 = vunpack.c.l.b16 %v24
  %v97 = vunpack.c.l.b16 %v25
  %v98 = vpack.c.b16 %v97, %v96
  %vm99 = vcmask 15360
  %v101 = vsel %vm99, %v98, 0
  %vm103 = vcmask 1040384
  %v105 = vsel %vm103, %v93, 0
  %107 = vmatprep.subr.bf16.mxu0 0
  %108 = vmatpush1.bf16.msra.mxu0 0
  %109 = vmatprep.subr.bf16.mxu0 0
  %110 = vmatpush1.bf16.msra.mxu0 0
  %111 = vmatprep.subr.bf16.mxu0 0
  %112 = vmatpush1.bf16.msra.mxu0 0
  %113 = vmatprep.subr.bf16.mxu0 0
  %114 = vmatpush1.bf16.msra.mxu0 0
  %115 = vmatprep.subr.bf16.mxu0 0
  %116 = vmatpush1.bf16.msra.mxu0 0
  %117 = vmatprep.subr.bf16.mxu0 0
  %118 = vmatpush1.bf16.msra.mxu0 0
  %119 = vmatprep.subr.bf16.mxu0 0
  %120 = vmatpush1.bf16.msra.mxu0 0
  %121 = vmatprep.subr.bf16.mxu0 0
  %122 = vmatpush1.bf16.msra.mxu0 %v105
  %123 = vmatprep.subr.bf16.mxu0 0
  %124 = vmatpush2.bf16.msra.mxu0 0
  %125 = vmatprep.subr.bf16.mxu0 0
  %126 = vmatpush2.bf16.msra.mxu0 0
  %127 = vmatprep.subr.bf16.mxu0 0
  %128 = vmatpush2.bf16.msra.mxu0 0
  %129 = vmatprep.subr.bf16.mxu0 0
  %130 = vmatpush2.bf16.msra.mxu0 0
  %131 = vmatprep.subr.bf16.mxu0 0
  %132 = vmatpush2.bf16.msra.mxu0 0
  %133 = vmatprep.subr.bf16.mxu0 0
  %134 = vmatpush2.bf16.msra.mxu0 0
  %135 = vmatprep.subr.bf16.mxu0 0
  %136 = vmatpush2.bf16.msra.mxu0 0
  %137 = vmatprep.subr.bf16.mxu0 0
  %138 = vmatpush2.bf16.msra.mxu0 0
  %139 = vmatprep.mubr.bf16.mxu0 0
  %140 = vmatmul.mubr.bf16.gmra.mxu0 %v101
  %v141 = vpop.f32.mrf.mxu0
  %v142 = vadd.f32 0.0, %v141
  %v143 = vpop.f32.mrf.mxu0
  %v144 = vpop.f32.mrf.mxu0
  %v145 = vadd.f32 0.0, %v144
  %v146 = vpop.f32.mrf.mxu0
  %147 = vdwg.mxu0
  %v148 = vsub.f32 %v87, %v142
  %v149 = vsub.f32 %v90, %v145
  %v150 = vmax.f32 %v148, 0.0
  %v151 = vmax.f32 %v149, 0.0
  %vm152 = vcmask 64512
  %153 = vst.msk [vmem:[%s5] sm:$0xff] %vm152, %v150
  %154 = vst.msk [vmem:[%s5 + $0x8] sm:$0xff] %vm152, %v151
  %v155 = vunpack.c.l.bf16 %v24
  %v156 = vunpack.c.l.bf16 %v25
  %v157 = vsel %vm99, %v155, 0.0
  %158 = vadd.xlane.f32.xlu0 %v157
  %v159 = vpop.xlane.xlu0 %158
  %v160 = vsel %vm99, %v156, 0.0
  %161 = vadd.xlane.f32.xlu0 %v160
  %v162 = vpop.xlane.xlu0 %161
  %v163 = vmul.f32 %v150, %v159
  %v164 = vmul.f32 %v151, %v162
  %v165 = vsel %vm152, %v163, 0.0
  %v166 = vsel %vm152, %v164, 0.0
  %v167 = vadd.f32 %v165, %v166
  %v168 = vrot.slane %v167, 4
  %v169 = vadd.f32 %v167, %v168
  %v170 = vrot.slane %v169, 2
  %v171 = vadd.f32 %v169, %v170
  %v172 = vrot.slane %v171, 1
  %v173 = vadd.f32 %v171, %v172
  %vm174 = vcmask 57344
  %175 = vst.msk [vmem:[%s6] sm:$0x1] %vm174, %v173
  %v176 = vmul.f32 %v163, %v163
  %v177 = vmul.f32 %v164, %v164
  %v178 = vsel %vm152, %v176, 0.0
  %v179 = vsel %vm152, %v177, 0.0
  %v180 = vadd.f32 %v178, %v179
  %v181 = vrot.slane %v180, 4
  %v182 = vadd.f32 %v180, %v181
  %v183 = vrot.slane %v182, 2
  %v184 = vadd.f32 %v182, %v183
  %v185 = vrot.slane %v184, 1
  %v186 = vadd.f32 %v184, %v185
  %187 = vst.msk [vmem:[%s7] sm:$0x1] %vm174, %v186
  // Predicated region
  $region22: #{_togl_forward_impl.8} parent=0 // pred_check
    _
  $region23: #{_togl_forward_impl.8} parent=0 // pred_check_branch
    %189 = sbr.rel (0) target = $region25
  $region24: #{_togl_forward_impl.8} parent=0 // pred_region
    _
  $region25: #{_togl_forward_impl.8} parent=0 // pred_fallthru
    _
  // Predicated region
  $region26: #{_togl_forward_impl.8} parent=0 // pred_check
    _
  $region27: #{_togl_forward_impl.8} parent=0 // pred_check_branch
    %191 = sbr.rel (0) target = $region29
  $region28: #{_togl_forward_impl.8} parent=0 // pred_region
    _
  $region29: #{_togl_forward_impl.8} parent=0 // pred_fallthru
    _
  // Predicated region
  $region30: #{_togl_forward_impl.8} parent=0 // pred_check
    _
  $region31: #{_togl_forward_impl.8} parent=0 // pred_check_branch
    %193 = sbr.rel (0) target = $region33
  $region32: #{_togl_forward_impl.8} parent=0 // pred_region
    _
  $region33: #{_togl_forward_impl.8} parent=0 // pred_fallthru
    _
  // Predicated region
  $region34: #{_togl_forward_impl.8} parent=0 // pred_check
    _
  $region35: #{_togl_forward_impl.8} parent=0 // pred_check_branch
    %195 = sbr.rel (0) target = $region37
  $region36: #{_togl_forward_impl.8} parent=0 // pred_region
    _
  $region37: #{_togl_forward_impl.8} parent=0 // pred_fallthru
    _
  // Predicated region
  $region38: #{_togl_forward_impl.8} parent=0 // pred_check
    _
  $region39: #{_togl_forward_impl.8} parent=0 // pred_check_branch
    %197 = sbr.rel (0) target = $region41
  $region40: #{_togl_forward_impl.8} parent=0 // pred_region
    _
  $region41: #{_togl_forward_impl.8} parent=0 // pred_fallthru
    _
  // Predicated region
  $region42: #{_togl_forward_impl.8} parent=0 // pred_check
    _
  $region43: #{_togl_forward_impl.8} parent=0 // pred_check_branch
    %199 = sbr.rel (0) target = $region45
  $region44: #{_togl_forward_impl.8} parent=0 // pred_region
    _
  $region45: #{_togl_forward_impl.8} parent=0 // pred_fallthru
    _

// kernel: _togl_forward_impl.10
$region0: #{_togl_forward_impl.10}
  #allocation0 [shape = 'u32[]', space=smem, size = 0x4, offset = 0x4, fixed_abs, tag = 'smem constant byte address 0x4 - core index']
  #allocation1 [shape = 'u32[144,128]{1,0:T(1,128)}', space=vmem, size = 0x12000, scoped, tag = 'internal scratch']
  %s0 = inlined_call_operand.vmem [shape: f32[16,8], index: 0, kind: input, shape index: {}]
  %s1 = inlined_call_operand.vmem [shape: bf16[8,512], index: 1, kind: input, shape index: {}]
  %s2 = inlined_call_operand.vmem [shape: f32[1,512], index: 2, kind: input, shape index: {}]
  %s3 = inlined_call_operand.vmem [shape: bf16[4,128,128], index: 3, kind: input, shape index: {}]
  %s4 = inlined_call_operand.vmem [shape: bf16[16,512], index: 4, kind: output, shape index: {0}]
  %s5 = inlined_call_operand.vmem [shape: bf16[16,512], index: 5, kind: output, shape index: {1}]
  %6 = xla_tuple %s4, %s5
  %s7 = sld [smem:[#allocation0]]
  $region34: #{_togl_forward_impl.10} parent=0
    _
  %s9 = ssub.s32 1, %s7
  %s10 = scalar_select 0, %s9, %s7
  // Predicated region
  $region2: #{_togl_forward_impl.10} parent=0 // pred_check
    _
  $region3: #{_togl_forward_impl.10} parent=0 // pred_check_branch
    %12 = sbr.rel (0) target = $region5
  $region4: #{_togl_forward_impl.10} parent=0 // pred_region
    _
  $region5: #{_togl_forward_impl.10} parent=0 // pred_fallthru
    _
  // Predicated region
  $region6: #{_togl_forward_impl.10} parent=0 // pred_check
    _
  $region7: #{_togl_forward_impl.10} parent=0 // pred_check_branch
    %14 = sbr.rel (0) target = $region9
  $region8: #{_togl_forward_impl.10} parent=0 // pred_region
    _
  $region9: #{_togl_forward_impl.10} parent=0 // pred_fallthru
    _
  // Predicated region
  $region10: #{_togl_forward_impl.10} parent=0 // pred_check
    _
  $region11: #{_togl_forward_impl.10} parent=0 // pred_check_branch
    %16 = sbr.rel (0) target = $region13
  $region12: #{_togl_forward_impl.10} parent=0 // pred_region
    _
  $region13: #{_togl_forward_impl.10} parent=0 // pred_fallthru
    _
  // Predicated region
  $region14: #{_togl_forward_impl.10} parent=0 // pred_check
    _
  $region15: #{_togl_forward_impl.10} parent=0 // pred_check_branch
    %18 = sbr.rel (0) target = $region17
  $region16: #{_togl_forward_impl.10} parent=0 // pred_region
    _
  $region17: #{_togl_forward_impl.10} parent=0 // pred_fallthru
    _
  %v20 = vld [vmem:[%s0] sm:$0xff]
  %v21 = vld [vmem:[%s0 + $0x8] sm:$0xff]
  %v22 = vpack.c.bf16 %v21, %v20
  %v23 = vld [vmem:[%s1] sm:$0xff]
  %v24 = vld [vmem:[%s1 + $0x8] sm:$0xff]
  %v25 = vld [vmem:[%s2] sm:$0xf]
  %v27 = vlaneseq
  %v28 = vshrl.u32 %v27, 7
  %v29 = vsub.s32 0, %v28
  %v30 = vrot.slane %v25, %v29
  %v31 = vlaneseq
  %v32 = vshrl.u32 %v31, 7
  %v33 = vsub.s32 1, %v32
  %v34 = vrot.slane %v25, %v33
  %v35 = vlaneseq
  %v36 = vshrl.u32 %v35, 7
  %v37 = vsub.s32 2, %v36
  %v38 = vrot.slane %v25, %v37
  %v39 = vlaneseq
  %v40 = vshrl.u32 %v39, 7
  %v41 = vsub.s32 3, %v40
  %v42 = vrot.slane %v25, %v41
  %v49 = vunpack.c.l.b16 %v23
  %v50 = vunpack.c.h.b16 %v23
  %v51 = vunpack.c.l.b16 %v24
  %v52 = vunpack.c.h.b16 %v24
  %v53 = vpack.c.b16 %v49, %v49
  %v54 = vpack.c.b16 %v50, %v50
  %v55 = vpack.c.b16 %v51, %v51
  %v56 = vpack.c.b16 %v52, %v52
  %vm57 = vcmask 64512
  %v59 = vsel %vm57, %v22, 0
  %vm61 = vcmask 1043456
  %v63 = vsel %vm61, %v53, 0
  %v66 = vsel %vm61, %v54, 0
  %v69 = vsel %vm61, %v55, 0
  %v72 = vsel %vm61, %v56, 0
  %74 = vmatprep.subr.bf16.mxu0 0
  %75 = vmatpush1.bf16.msra.mxu0 0
  %76 = vmatprep.subr.bf16.mxu0 0
  %77 = vmatpush1.bf16.msra.mxu0 0
  %78 = vmatprep.subr.bf16.mxu0 0
  %79 = vmatpush1.bf16.msra.mxu0 0
  %80 = vmatprep.subr.bf16.mxu0 0
  %81 = vmatpush1.bf16.msra.mxu0 0
  %82 = vmatprep.subr.bf16.mxu0 0
  %83 = vmatpush1.bf16.msra.mxu0 0
  %84 = vmatprep.subr.bf16.mxu0 0
  %85 = vmatpush1.bf16.msra.mxu0 0
  %86 = vmatprep.subr.bf16.mxu0 0
  %87 = vmatpush1.bf16.msra.mxu0 0
  %88 = vmatprep.subr.bf16.mxu0 %v66
  %89 = vmatpush1.bf16.msra.mxu0 %v63
  %90 = vmatprep.subr.bf16.mxu0 0
  %91 = vmatpush2.bf16.msra.mxu0 0
  %92 = vmatprep.subr.bf16.mxu0 0
  %93 = vmatpush2.bf16.msra.mxu0 0
  %94 = vmatprep.subr.bf16.mxu0 0
  %95 = vmatpush2.bf16.msra.mxu0 0
  %96 = vmatprep.subr.bf16.mxu0 0
  %97 = vmatpush2.bf16.msra.mxu0 0
  %98 = vmatprep.subr.bf16.mxu0 0
  %99 = vmatpush2.bf16.msra.mxu0 0
  %100 = vmatprep.subr.bf16.mxu0 0
  %101 = vmatpush2.bf16.msra.mxu0 0
  %102 = vmatprep.subr.bf16.mxu0 0
  %103 = vmatpush2.bf16.msra.mxu0 0
  %104 = vmatprep.subr.bf16.mxu0 0
  %105 = vmatpush2.bf16.msra.mxu0 0
  %106 = vmatprep.mubr.bf16.mxu0 0
  %107 = vmatmul.mubr.bf16.gmra.mxu0 %v59
  %v108 = vpop.f32.mrf.mxu0
  %v109 = vadd.f32 %v30, %v108
  %v110 = vpop.f32.mrf.mxu0
  %v111 = vadd.f32 %v34, %v110
  %v112 = vpop.f32.mrf.mxu0
  %v113 = vadd.f32 %v30, %v112
  %v114 = vpop.f32.mrf.mxu0
  %v115 = vadd.f32 %v34, %v114
  %116 = vdwg.mxu0
  %117 = vmatprep.subr.bf16.mxu0 0
  %118 = vmatpush1.bf16.msra.mxu0 0
  %119 = vmatprep.subr.bf16.mxu0 0
  %120 = vmatpush1.bf16.msra.mxu0 0
  %121 = vmatprep.subr.bf16.mxu0 0
  %122 = vmatpush1.bf16.msra.mxu0 0
  %123 = vmatprep.subr.bf16.mxu0 0
  %124 = vmatpush1.bf16.msra.mxu0 0
  %125 = vmatprep.subr.bf16.mxu0 0
  %126 = vmatpush1.bf16.msra.mxu0 0
  %127 = vmatprep.subr.bf16.mxu0 0
  %128 = vmatpush1.bf16.msra.mxu0 0
  %129 = vmatprep.subr.bf16.mxu0 0
  %130 = vmatpush1.bf16.msra.mxu0 0
  %131 = vmatprep.subr.bf16.mxu0 %v72
  %132 = vmatpush1.bf16.msra.mxu0 %v69
  %133 = vmatprep.subr.bf16.mxu0 0
  %134 = vmatpush2.bf16.msra.mxu0 0
  %135 = vmatprep.subr.bf16.mxu0 0
  %136 = vmatpush2.bf16.msra.mxu0 0
  %137 = vmatprep.subr.bf16.mxu0 0
  %138 = vmatpush2.bf16.msra.mxu0 0
  %139 = vmatprep.subr.bf16.mxu0 0
  %140 = vmatpush2.bf16.msra.mxu0 0
  %141 = vmatprep.subr.bf16.mxu0 0
  %142 = vmatpush2.bf16.msra.mxu0 0
  %143 = vmatprep.subr.bf16.mxu0 0
  %144 = vmatpush2.bf16.msra.mxu0 0
  %145 = vmatprep.subr.bf16.mxu0 0
  %146 = vmatpush2.bf16.msra.mxu0 0
  %147 = vmatprep.subr.bf16.mxu0 0
  %148 = vmatpush2.bf16.msra.mxu0 0
  %149 = vmatprep.mubr.bf16.mxu0 0
  %150 = vmatmul.mubr.bf16.gmra.mxu0 %v59
  %v151 = vpop.f32.mrf.mxu0
  %v152 = vadd.f32 %v38, %v151
  %v153 = vpop.f32.mrf.mxu0
  %v154 = vadd.f32 %v42, %v153
  %v155 = vpop.f32.mrf.mxu0
  %v156 = vadd.f32 %v38, %v155
  %v157 = vpop.f32.mrf.mxu0
  %v158 = vadd.f32 %v42, %v157
  %159 = vdwg.mxu0
  %v160 = vpack.c.bf16 %v113, %v109
  %v161 = vpack.c.bf16 %v115, %v111
  %v162 = vpack.c.bf16 %v156, %v152
  %v163 = vpack.c.bf16 %v158, %v154
  %v168 = vunpack.c.l.b16 %v160
  %v169 = vunpack.c.l.b16 %v161
  %v170 = vunpack.c.l.b16 %v162
  %v171 = vunpack.c.l.b16 %v163
  %v172 = vunpack.c.h.b16 %v160
  %v173 = vunpack.c.h.b16 %v161
  %v174 = vunpack.c.h.b16 %v162
  %v175 = vunpack.c.h.b16 %v163
  %v176 = vpack.c.b16 %v169, %v168
  %v177 = vpack.c.b16 %v171, %v170
  %v178 = vpack.c.b16 %v173, %v172
  %v179 = vpack.c.b16 %v175, %v174
  %184 = vst [vmem:[%s4] sm:$0xff] %v176
  %185 = vst [vmem:[%s4 + $0x8] sm:$0xff] %v177
  %186 = vst [vmem:[%s4 + $0x10] sm:$0xff] %v178
  %187 = vst [vmem:[%s4 + $0x18] sm:$0xff] %v179
  %v188 = vld [vmem:[%s3] sm:$0xf]
  %v189 = vld [vmem:[%s3 + $0x4] sm:$0xf]
  %v190 = vld [vmem:[%s3 + $0x8] sm:$0xf]
  %v191 = vld [vmem:[%s3 + $0xc] sm:$0xf]
  %v192 = vld [vmem:[%s3 + $0x10] sm:$0xf]
  %v193 = vld [vmem:[%s3 + $0x14] sm:$0xf]
  %v194 = vld [vmem:[%s3 + $0x18] sm:$0xf]
  %v195 = vld [vmem:[%s3 + $0x1c] sm:$0xf]
  %v196 = vld [vmem:[%s3 + $0x20] sm:$0xf]
  %v197 = vld [vmem:[%s3 + $0x24] sm:$0xf]
  %v198 = vld [vmem:[%s3 + $0x28] sm:$0xf]
  %v199 = vld [vmem:[%s3 + $0x2c] sm:$0xf]
  %v200 = vld [vmem:[%s3 + $0x30] sm:$0xf]
  %v201 = vld [vmem:[%s3 + $0x34] sm:$0xf]
  %v202 = vld [vmem:[%s3 + $0x38] sm:$0xf]
  %v203 = vld [vmem:[%s3 + $0x3c] sm:$0xf]
  %v220 = vunpack.c.l.b16 %v188
  %v221 = vunpack.c.l.b16 %v189
  %v222 = vunpack.c.l.b16 %v190
  %v223 = vunpack.c.l.b16 %v191
  %v224 = vunpack.c.l.b16 %v192
  %v225 = vunpack.c.l.b16 %v193
  %v226 = vunpack.c.l.b16 %v194
  %v227 = vunpack.c.l.b16 %v195
  %v228 = vunpack.c.l.b16 %v196
  %v229 = vunpack.c.l.b16 %v197
  %v230 = vunpack.c.l.b16 %v198
  %v231 = vunpack.c.l.b16 %v199
  %v232 = vunpack.c.l.b16 %v200
  %v233 = vunpack.c.l.b16 %v201
  %v234 = vunpack.c.l.b16 %v202
  %v235 = vunpack.c.l.b16 %v203
  %v236 = vpack.c.b16 %v221, %v220
  %v237 = vpack.c.b16 %v223, %v222
  %v238 = vpack.c.b16 %v225, %v224
  %v239 = vpack.c.b16 %v227, %v226
  %v240 = vpack.c.b16 %v229, %v228
  %v241 = vpack.c.b16 %v231, %v230
  %v242 = vpack.c.b16 %v233, %v232
  %v243 = vpack.c.b16 %v235, %v234
  %252 = vmatprep.subr.bf16.mxu0 0
  %253 = vmatpush1.bf16.msra.mxu0 %v243
  %254 = vmatprep.subr.bf16.mxu0 0
  %255 = vmatpush1.bf16.msra.mxu0 %v242
  %256 = vmatprep.subr.bf16.mxu0 0
  %257 = vmatpush1.bf16.msra.mxu0 %v241
  %258 = vmatprep.subr.bf16.mxu0 0
  %259 = vmatpush1.bf16.msra.mxu0 %v240
  %260 = vmatprep.subr.bf16.mxu0 0
  %261 = vmatpush1.bf16.msra.mxu0 %v239
  %262 = vmatprep.subr.bf16.mxu0 0
  %263 = vmatpush1.bf16.msra.mxu0 %v238
  %264 = vmatprep.subr.bf16.mxu0 0
  %265 = vmatpush1.bf16.msra.mxu0 %v237
  %266 = vmatprep.subr.bf16.mxu0 0
  %267 = vmatpush1.bf16.msra.mxu0 %v236
  %268 = vmatprep.subr.bf16.mxu0 0
  %269 = vmatpush2.bf16.msra.mxu0 0
  %270 = vmatprep.subr.bf16.mxu0 0
  %271 = vmatpush2.bf16.msra.mxu0 0
  %272 = vmatprep.subr.bf16.mxu0 0
  %273 = vmatpush2.bf16.msra.mxu0 0
  %274 = vmatprep.subr.bf16.mxu0 0
  %275 = vmatpush2.bf16.msra.mxu0 0
  %276 = vmatprep.subr.bf16.mxu0 0
  %277 = vmatpush2.bf16.msra.mxu0 0
  %278 = vmatprep.subr.bf16.mxu0 0
  %279 = vmatpush2.bf16.msra.mxu0 0
  %280 = vmatprep.subr.bf16.mxu0 0
  %281 = vmatpush2.bf16.msra.mxu0 0
  %282 = vmatprep.subr.bf16.mxu0 0
  %283 = vmatpush2.bf16.msra.mxu0 0
  %284 = vmatprep.mubr.bf16.mxu0 0
  %285 = vmatmul.mubr.bf16.gmra.mxu0 %v160
  %v286 = vpop.f32.mrf.mxu0
  %v287 = vadd.f32 0.0, %v286
  %v288 = vpop.f32.mrf.mxu0
  %v289 = vpop.f32.mrf.mxu0
  %v290 = vadd.f32 0.0, %v289
  %v291 = vpop.f32.mrf.mxu0
  %292 = vdwg.mxu0
  %v293 = vpack.c.bf16 %v290, %v287
  %v295 = vunpack.c.l.b16 %v293
  %v296 = vunpack.c.h.b16 %v293
  %v297 = vpack.c.b16 %v295, %v295
  %v298 = vpack.c.b16 %v296, %v296
  %301 = vst [vmem:[%s5] sm:$0xf] %v297
  %302 = vst [vmem:[%s5 + $0x10] sm:$0xf] %v298
  %s303 = scalar_lea.vmem %s3, 64
  %v304 = vld [vmem:[%s303] sm:$0xf]
  %v305 = vld [vmem:[%s303 + $0x4] sm:$0xf]
  %v306 = vld [vmem:[%s303 + $0x8] sm:$0xf]
  %v307 = vld [vmem:[%s303 + $0xc] sm:$0xf]
  %v308 = vld [vmem:[%s303 + $0x10] sm:$0xf]
  %v309 = vld [vmem:[%s303 + $0x14] sm:$0xf]
  %v310 = vld [vmem:[%s303 + $0x18] sm:$0xf]
  %v311 = vld [vmem:[%s303 + $0x1c] sm:$0xf]
  %v312 = vld [vmem:[%s303 + $0x20] sm:$0xf]
  %v313 = vld [vmem:[%s303 + $0x24] sm:$0xf]
  %v314 = vld [vmem:[%s303 + $0x28] sm:$0xf]
  %v315 = vld [vmem:[%s303 + $0x2c] sm:$0xf]
  %v316 = vld [vmem:[%s303 + $0x30] sm:$0xf]
  %v317 = vld [vmem:[%s303 + $0x34] sm:$0xf]
  %v318 = vld [vmem:[%s303 + $0x38] sm:$0xf]
  %v319 = vld [vmem:[%s303 + $0x3c] sm:$0xf]
  %v336 = vunpack.c.l.b16 %v304
  %v337 = vunpack.c.l.b16 %v305
  %v338 = vunpack.c.l.b16 %v306
  %v339 = vunpack.c.l.b16 %v307
  %v340 = vunpack.c.l.b16 %v308
  %v341 = vunpack.c.l.b16 %v309
  %v342 = vunpack.c.l.b16 %v310
  %v343 = vunpack.c.l.b16 %v311
  %v344 = vunpack.c.l.b16 %v312
  %v345 = vunpack.c.l.b16 %v313
  %v346 = vunpack.c.l.b16 %v314
  %v347 = vunpack.c.l.b16 %v315
  %v348 = vunpack.c.l.b16 %v316
  %v349 = vunpack.c.l.b16 %v317
  %v350 = vunpack.c.l.b16 %v318
  %v351 = vunpack.c.l.b16 %v319
  %v352 = vpack.c.b16 %v337, %v336
  %v353 = vpack.c.b16 %v339, %v338
  %v354 = vpack.c.b16 %v341, %v340
  %v355 = vpack.c.b16 %v343, %v342
  %v356 = vpack.c.b16 %v345, %v344
  %v357 = vpack.c.b16 %v347, %v346
  %v358 = vpack.c.b16 %v349, %v348
  %v359 = vpack.c.b16 %v351, %v350
  %368 = vmatprep.subr.bf16.mxu0 0
  %369 = vmatpush1.bf16.msra.mxu0 %v359
  %370 = vmatprep.subr.bf16.mxu0 0
  %371 = vmatpush1.bf16.msra.mxu0 %v358
  %372 = vmatprep.subr.bf16.mxu0 0
  %373 = vmatpush1.bf16.msra.mxu0 %v357
  %374 = vmatprep.subr.bf16.mxu0 0
  %375 = vmatpush1.bf16.msra.mxu0 %v356
  %376 = vmatprep.subr.bf16.mxu0 0
  %377 = vmatpush1.bf16.msra.mxu0 %v355
  %378 = vmatprep.subr.bf16.mxu0 0
  %379 = vmatpush1.bf16.msra.mxu0 %v354
  %380 = vmatprep.subr.bf16.mxu0 0
  %381 = vmatpush1.bf16.msra.mxu0 %v353
  %382 = vmatprep.subr.bf16.mxu0 0
  %383 = vmatpush1.bf16.msra.mxu0 %v352
  %384 = vmatprep.subr.bf16.mxu0 0
  %385 = vmatpush2.bf16.msra.mxu0 0
  %386 = vmatprep.subr.bf16.mxu0 0
  %387 = vmatpush2.bf16.msra.mxu0 0
  %388 = vmatprep.subr.bf16.mxu0 0
  %389 = vmatpush2.bf16.msra.mxu0 0
  %390 = vmatprep.subr.bf16.mxu0 0
  %391 = vmatpush2.bf16.msra.mxu0 0
  %392 = vmatprep.subr.bf16.mxu0 0
  %393 = vmatpush2.bf16.msra.mxu0 0
  %394 = vmatprep.subr.bf16.mxu0 0
  %395 = vmatpush2.bf16.msra.mxu0 0
  %396 = vmatprep.subr.bf16.mxu0 0
  %397 = vmatpush2.bf16.msra.mxu0 0
  %398 = vmatprep.subr.bf16.mxu0 0
  %399 = vmatpush2.bf16.msra.mxu0 0
  %400 = vmatprep.mubr.bf16.mxu0 0
  %401 = vmatmul.mubr.bf16.gmra.mxu0 %v161
  %v402 = vpop.f32.mrf.mxu0
  %v403 = vadd.f32 0.0, %v402
  %v404 = vpop.f32.mrf.mxu0
  %v405 = vpop.f32.mrf.mxu0
  %v406 = vadd.f32 0.0, %v405
  %v407 = vpop.f32.mrf.mxu0
  %408 = vdwg.mxu0
  %v409 = vpack.c.bf16 %v406, %v403
  %v411 = vunpack.c.l.b16 %v409
  %v412 = vunpack.c.h.b16 %v409
  %v413 = vpack.c.b16 %v411, %v411
  %v414 = vpack.c.b16 %v412, %v412
  %417 = vst [vmem:[%s5 + $0x4] sm:$0xf] %v413
  %418 = vst [vmem:[%s5 + $0x14] sm:$0xf] %v414
  %s419 = scalar_lea.vmem %s3, 128
  %v420 = vld [vmem:[%s419] sm:$0xf]
  %v421 = vld [vmem:[%s419 + $0x4] sm:$0xf]
  %v422 = vld [vmem:[%s419 + $0x8] sm:$0xf]
  %v423 = vld [vmem:[%s419 + $0xc] sm:$0xf]
  %v424 = vld [vmem:[%s419 + $0x10] sm:$0xf]
  %v425 = vld [vmem:[%s419 + $0x14] sm:$0xf]
  %v426 = vld [vmem:[%s419 + $0x18] sm:$0xf]
  %v427 = vld [vmem:[%s419 + $0x1c] sm:$0xf]
  %v428 = vld [vmem:[%s419 + $0x20] sm:$0xf]
  %v429 = vld [vmem:[%s419 + $0x24] sm:$0xf]
  %v430 = vld [vmem:[%s419 + $0x28] sm:$0xf]
  %v431 = vld [vmem:[%s419 + $0x2c] sm:$0xf]
  %v432 = vld [vmem:[%s419 + $0x30] sm:$0xf]
  %v433 = vld [vmem:[%s419 + $0x34] sm:$0xf]
  %v434 = vld [vmem:[%s419 + $0x38] sm:$0xf]
  %v435 = vld [vmem:[%s419 + $0x3c] sm:$0xf]
  %v452 = vunpack.c.l.b16 %v420
  %v453 = vunpack.c.l.b16 %v421
  %v454 = vunpack.c.l.b16 %v422
  %v455 = vunpack.c.l.b16 %v423
  %v456 = vunpack.c.l.b16 %v424
  %v457 = vunpack.c.l.b16 %v425
  %v458 = vunpack.c.l.b16 %v426
  %v459 = vunpack.c.l.b16 %v427
  %v460 = vunpack.c.l.b16 %v428
  %v461 = vunpack.c.l.b16 %v429
  %v462 = vunpack.c.l.b16 %v430
  %v463 = vunpack.c.l.b16 %v431
  %v464 = vunpack.c.l.b16 %v432
  %v465 = vunpack.c.l.b16 %v433
  %v466 = vunpack.c.l.b16 %v434
  %v467 = vunpack.c.l.b16 %v435
  %v468 = vpack.c.b16 %v453, %v452
  %v469 = vpack.c.b16 %v455, %v454
  %v470 = vpack.c.b16 %v457, %v456
  %v471 = vpack.c.b16 %v459, %v458
  %v472 = vpack.c.b16 %v461, %v460
  %v473 = vpack.c.b16 %v463, %v462
  %v474 = vpack.c.b16 %v465, %v464
  %v475 = vpack.c.b16 %v467, %v466
  %484 = vmatprep.subr.bf16.mxu0 0
  %485 = vmatpush1.bf16.msra.mxu0 %v475
  %486 = vmatprep.subr.bf16.mxu0 0
  %487 = vmatpush1.bf16.msra.mxu0 %v474
  %488 = vmatprep.subr.bf16.mxu0 0
  %489 = vmatpush1.bf16.msra.mxu0 %v473
  %490 = vmatprep.subr.bf16.mxu0 0
  %491 = vmatpush1.bf16.msra.mxu0 %v472
  %492 = vmatprep.subr.bf16.mxu0 0
  %493 = vmatpush1.bf16.msra.mxu0 %v471
  %494 = vmatprep.subr.bf16.mxu0 0
  %495 = vmatpush1.bf16.msra.mxu0 %v470
  %496 = vmatprep.subr.bf16.mxu0 0
  %497 = vmatpush1.bf16.msra.mxu0 %v469
  %498 = vmatprep.subr.bf16.mxu0 0
  %499 = vmatpush1.bf16.msra.mxu0 %v468
  %500 = vmatprep.subr.bf16.mxu0 0
  %501 = vmatpush2.bf16.msra.mxu0 0
  %502 = vmatprep.subr.bf16.mxu0 0
  %503 = vmatpush2.bf16.msra.mxu0 0
  %504 = vmatprep.subr.bf16.mxu0 0
  %505 = vmatpush2.bf16.msra.mxu0 0
  %506 = vmatprep.subr.bf16.mxu0 0
  %507 = vmatpush2.bf16.msra.mxu0 0
  %508 = vmatprep.subr.bf16.mxu0 0
  %509 = vmatpush2.bf16.msra.mxu0 0
  %510 = vmatprep.subr.bf16.mxu0 0
  %511 = vmatpush2.bf16.msra.mxu0 0
  %512 = vmatprep.subr.bf16.mxu0 0
  %513 = vmatpush2.bf16.msra.mxu0 0
  %514 = vmatprep.subr.bf16.mxu0 0
  %515 = vmatpush2.bf16.msra.mxu0 0
  %516 = vmatprep.mubr.bf16.mxu0 0
  %517 = vmatmul.mubr.bf16.gmra.mxu0 %v162
  %v518 = vpop.f32.mrf.mxu0
  %v519 = vadd.f32 0.0, %v518
  %v520 = vpop.f32.mrf.mxu0
  %v521 = vpop.f32.mrf.mxu0
  %v522 = vadd.f32 0.0, %v521
  %v523 = vpop.f32.mrf.mxu0
  %524 = vdwg.mxu0
  %v525 = vpack.c.bf16 %v522, %v519
  %v527 = vunpack.c.l.b16 %v525
  %v528 = vunpack.c.h.b16 %v525
  %v529 = vpack.c.b16 %v527, %v527
  %v530 = vpack.c.b16 %v528, %v528
  %533 = vst [vmem:[%s5 + $0x8] sm:$0xf] %v529
  %534 = vst [vmem:[%s5 + $0x18] sm:$0xf] %v530
  %s535 = scalar_lea.vmem %s3, 192
  %v536 = vld [vmem:[%s535] sm:$0xf]
  %v537 = vld [vmem:[%s535 + $0x4] sm:$0xf]
  %v538 = vld [vmem:[%s535 + $0x8] sm:$0xf]
  %v539 = vld [vmem:[%s535 + $0xc] sm:$0xf]
  %v540 = vld [vmem:[%s535 + $0x10] sm:$0xf]
  %v541 = vld [vmem:[%s535 + $0x14] sm:$0xf]
  %v542 = vld [vmem:[%s535 + $0x18] sm:$0xf]
  %v543 = vld [vmem:[%s535 + $0x1c] sm:$0xf]
  %v544 = vld [vmem:[%s535 + $0x20] sm:$0xf]
  %v545 = vld [vmem:[%s535 + $0x24] sm:$0xf]
  %v546 = vld [vmem:[%s535 + $0x28] sm:$0xf]
  %v547 = vld [vmem:[%s535 + $0x2c] sm:$0xf]
  %v548 = vld [vmem:[%s535 + $0x30] sm:$0xf]
  %v549 = vld [vmem:[%s535 + $0x34] sm:$0xf]
  %v550 = vld [vmem:[%s535 + $0x38] sm:$0xf]
  %v551 = vld [vmem:[%s535 + $0x3c] sm:$0xf]
  %v568 = vunpack.c.l.b16 %v536
  %v569 = vunpack.c.l.b16 %v537
  %v570 = vunpack.c.l.b16 %v538
  %v571 = vunpack.c.l.b16 %v539
  %v572 = vunpack.c.l.b16 %v540
  %v573 = vunpack.c.l.b16 %v541
  %v574 = vunpack.c.l.b16 %v542
  %v575 = vunpack.c.l.b16 %v543
  %v576 = vunpack.c.l.b16 %v544
  %v577 = vunpack.c.l.b16 %v545
  %v578 = vunpack.c.l.b16 %v546
  %v579 = vunpack.c.l.b16 %v547
  %v580 = vunpack.c.l.b16 %v548
  %v581 = vunpack.c.l.b16 %v549
  %v582 = vunpack.c.l.b16 %v550
  %v583 = vunpack.c.l.b16 %v551
  %v584 = vpack.c.b16 %v569, %v568
  %v585 = vpack.c.b16 %v571, %v570
  %v586 = vpack.c.b16 %v573, %v572
  %v587 = vpack.c.b16 %v575, %v574
  %v588 = vpack.c.b16 %v577, %v576
  %v589 = vpack.c.b16 %v579, %v578
  %v590 = vpack.c.b16 %v581, %v580
  %v591 = vpack.c.b16 %v583, %v582
  %600 = vmatprep.subr.bf16.mxu0 0
  %601 = vmatpush1.bf16.msra.mxu0 %v591
  %602 = vmatprep.subr.bf16.mxu0 0
  %603 = vmatpush1.bf16.msra.mxu0 %v590
  %604 = vmatprep.subr.bf16.mxu0 0
  %605 = vmatpush1.bf16.msra.mxu0 %v589
  %606 = vmatprep.subr.bf16.mxu0 0
  %607 = vmatpush1.bf16.msra.mxu0 %v588
  %608 = vmatprep.subr.bf16.mxu0 0
  %609 = vmatpush1.bf16.msra.mxu0 %v587
  %610 = vmatprep.subr.bf16.mxu0 0
  %611 = vmatpush1.bf16.msra.mxu0 %v586
  %612 = vmatprep.subr.bf16.mxu0 0
  %613 = vmatpush1.bf16.msra.mxu0 %v585
  %614 = vmatprep.subr.bf16.mxu0 0
  %615 = vmatpush1.bf16.msra.mxu0 %v584
  %616 = vmatprep.subr.bf16.mxu0 0
  %617 = vmatpush2.bf16.msra.mxu0 0
  %618 = vmatprep.subr.bf16.mxu0 0
  %619 = vmatpush2.bf16.msra.mxu0 0
  %620 = vmatprep.subr.bf16.mxu0 0
  %621 = vmatpush2.bf16.msra.mxu0 0
  %622 = vmatprep.subr.bf16.mxu0 0
  %623 = vmatpush2.bf16.msra.mxu0 0
  %624 = vmatprep.subr.bf16.mxu0 0
  %625 = vmatpush2.bf16.msra.mxu0 0
  %626 = vmatprep.subr.bf16.mxu0 0
  %627 = vmatpush2.bf16.msra.mxu0 0
  %628 = vmatprep.subr.bf16.mxu0 0
  %629 = vmatpush2.bf16.msra.mxu0 0
  %630 = vmatprep.subr.bf16.mxu0 0
  %631 = vmatpush2.bf16.msra.mxu0 0
  %632 = vmatprep.mubr.bf16.mxu0 0
  %633 = vmatmul.mubr.bf16.gmra.mxu0 %v163
  %v634 = vpop.f32.mrf.mxu0
  %v635 = vadd.f32 0.0, %v634
  %v636 = vpop.f32.mrf.mxu0
  %v637 = vpop.f32.mrf.mxu0
  %v638 = vadd.f32 0.0, %v637
  %v639 = vpop.f32.mrf.mxu0
  %640 = vdwg.mxu0
  %v641 = vpack.c.bf16 %v638, %v635
  %v643 = vunpack.c.l.b16 %v641
  %v644 = vunpack.c.h.b16 %v641
  %v645 = vpack.c.b16 %v643, %v643
  %v646 = vpack.c.b16 %v644, %v644
  %649 = vst [vmem:[%s5 + $0xc] sm:$0xf] %v645
  %650 = vst [vmem:[%s5 + $0x1c] sm:$0xf] %v646
  // Predicated region
  $region18: #{_togl_forward_impl.10} parent=0 // pred_check
    _
  $region19: #{_togl_forward_impl.10} parent=0 // pred_check_branch
    %652 = sbr.rel (0) target = $region21
  $region20: #{_togl_forward_impl.10} parent=0 // pred_region
    _
  $region21: #{_togl_forward_impl.10} parent=0 // pred_fallthru
    _
  // Predicated region
  $region22: #{_togl_forward_impl.10} parent=0 // pred_check
    _
  $region23: #{_togl_forward_impl.10} parent=0 // pred_check_branch
    %654 = sbr.rel (0) target = $region25
  $region24: #{_togl_forward_impl.10} parent=0 // pred_region
    _
  $region25: #{_togl_forward_impl.10} parent=0 // pred_fallthru
    _
  // Predicated region
  $region26: #{_togl_forward_impl.10} parent=0 // pred_check
    _
  $region27: #{_togl_forward_impl.10} parent=0 // pred_check_branch
    %656 = sbr.rel (0) target = $region29
  $region28: #{_togl_forward_impl.10} parent=0 // pred_region
    _
  $region29: #{_togl_forward_impl.10} parent=0 // pred_fallthru
    _
  // Predicated region
  $region30: #{_togl_forward_impl.10} parent=0 // pred_check
    _
  $region31: #{_togl_forward_impl.10} parent=0 // pred_check_branch
    %658 = sbr.rel (0) target = $region33
  $region32: #{_togl_forward_impl.10} parent=0 // pred_region
    _
  $region33: #{_togl_forward_impl.10} parent=0 // pred_fallthru
    _

// kernel: _togl_forward_impl.11
$region0: #{_togl_forward_impl.11}
  #allocation0 [shape = 'u32[]', space=smem, size = 0x4, offset = 0x4, fixed_abs, tag = 'smem constant byte address 0x4 - core index']
  #allocation1 [shape = 'u32[144,128]{1,0:T(1,128)}', space=vmem, size = 0x12000, scoped, tag = 'internal scratch']
  %s0 = inlined_call_operand.vmem [shape: bf16[1,128,512], index: 0, kind: input, shape index: {}]
  %s1 = inlined_call_operand.vmem [shape: bf16[1,128,512], index: 1, kind: input, shape index: {}]
  %s2 = inlined_call_operand.vmem [shape: f32[1,128], index: 2, kind: output, shape index: {}]
  %s3 = sld [smem:[#allocation0]]
  $region18: #{_togl_forward_impl.11} parent=0
    _
  %s5 = ssub.s32 1, %s3
  %s6 = scalar_select 0, %s5, %s3
  // Predicated region
  $region2: #{_togl_forward_impl.11} parent=0 // pred_check
    _
  $region3: #{_togl_forward_impl.11} parent=0 // pred_check_branch
    %8 = sbr.rel (0) target = $region5
  $region4: #{_togl_forward_impl.11} parent=0 // pred_region
    _
  $region5: #{_togl_forward_impl.11} parent=0 // pred_fallthru
    _
  // Predicated region
  $region6: #{_togl_forward_impl.11} parent=0 // pred_check
    _
  $region7: #{_togl_forward_impl.11} parent=0 // pred_check_branch
    %10 = sbr.rel (0) target = $region9
  $region8: #{_togl_forward_impl.11} parent=0 // pred_region
    _
  $region9: #{_togl_forward_impl.11} parent=0 // pred_fallthru
    _
  %v11 = vld [vmem:[%s0] sm:$0xff]
  %v12 = vld [vmem:[%s0 + $0x8] sm:$0xff]
  %v13 = vld [vmem:[%s0 + $0x10] sm:$0xff]
  %v14 = vld [vmem:[%s0 + $0x18] sm:$0xff]
  %v15 = vld [vmem:[%s0 + $0x20] sm:$0xff]
  %v16 = vld [vmem:[%s0 + $0x28] sm:$0xff]
  %v17 = vld [vmem:[%s0 + $0x30] sm:$0xff]
  %v18 = vld [vmem:[%s0 + $0x38] sm:$0xff]
  %v19 = vld [vmem:[%s0 + $0x40] sm:$0xff]
  %v20 = vld [vmem:[%s0 + $0x48] sm:$0xff]
  %v21 = vld [vmem:[%s0 + $0x50] sm:$0xff]
  %v22 = vld [vmem:[%s0 + $0x58] sm:$0xff]
  %v23 = vld [vmem:[%s0 + $0x60] sm:$0xff]
  %v24 = vld [vmem:[%s0 + $0x68] sm:$0xff]
  %v25 = vld [vmem:[%s0 + $0x70] sm:$0xff]
  %v26 = vld [vmem:[%s0 + $0x78] sm:$0xff]
  %v27 = vld [vmem:[%s0 + $0x80] sm:$0xff]
  %v28 = vld [vmem:[%s0 + $0x88] sm:$0xff]
  %v29 = vld [vmem:[%s0 + $0x90] sm:$0xff]
  %v30 = vld [vmem:[%s0 + $0x98] sm:$0xff]
  %v31 = vld [vmem:[%s0 + $0xa0] sm:$0xff]
  %v32 = vld [vmem:[%s0 + $0xa8] sm:$0xff]
  %v33 = vld [vmem:[%s0 + $0xb0] sm:$0xff]
  %v34 = vld [vmem:[%s0 + $0xb8] sm:$0xff]
  %v35 = vld [vmem:[%s0 + $0xc0] sm:$0xff]
  %v36 = vld [vmem:[%s0 + $0xc8] sm:$0xff]
  %v37 = vld [vmem:[%s0 + $0xd0] sm:$0xff]
  %v38 = vld [vmem:[%s0 + $0xd8] sm:$0xff]
  %v39 = vld [vmem:[%s0 + $0xe0] sm:$0xff]
  %v40 = vld [vmem:[%s0 + $0xe8] sm:$0xff]
  %v41 = vld [vmem:[%s0 + $0xf0] sm:$0xff]
  %v42 = vld [vmem:[%s0 + $0xf8] sm:$0xff]
  %v43 = vunpack.c.l.bf16 %v11
  %v44 = vunpack.c.h.bf16 %v11
  %v45 = vunpack.c.l.bf16 %v12
  %v46 = vunpack.c.h.bf16 %v12
  %v47 = vunpack.c.l.bf16 %v13
  %v48 = vunpack.c.h.bf16 %v13
  %v49 = vunpack.c.l.bf16 %v14
  %v50 = vunpack.c.h.bf16 %v14
  %v51 = vunpack.c.l.bf16 %v15
  %v52 = vunpack.c.h.bf16 %v15
  %v53 = vunpack.c.l.bf16 %v16
  %v54 = vunpack.c.h.bf16 %v16
  %v55 = vunpack.c.l.bf16 %v17
  %v56 = vunpack.c.h.bf16 %v17
  %v57 = vunpack.c.l.bf16 %v18
  %v58 = vunpack.c.h.bf16 %v18
  %v59 = vunpack.c.l.bf16 %v19
  %v60 = vunpack.c.h.bf16 %v19
  %v61 = vunpack.c.l.bf16 %v20
  %v62 = vunpack.c.h.bf16 %v20
  %v63 = vunpack.c.l.bf16 %v21
  %v64 = vunpack.c.h.bf16 %v21
  %v65 = vunpack.c.l.bf16 %v22
  %v66 = vunpack.c.h.bf16 %v22
  %v67 = vunpack.c.l.bf16 %v23
  %v68 = vunpack.c.h.bf16 %v23
  %v69 = vunpack.c.l.bf16 %v24
  %v70 = vunpack.c.h.bf16 %v24
  %v71 = vunpack.c.l.bf16 %v25
  %v72 = vunpack.c.h.bf16 %v25
  %v73 = vunpack.c.l.bf16 %v26
  %v74 = vunpack.c.h.bf16 %v26
  %v75 = vunpack.c.l.bf16 %v27
  %v76 = vunpack.c.h.bf16 %v27
  %v77 = vunpack.c.l.bf16 %v28
  %v78 = vunpack.c.h.bf16 %v28
  %v79 = vunpack.c.l.bf16 %v29
  %v80 = vunpack.c.h.bf16 %v29
  %v81 = vunpack.c.l.bf16 %v30
  %v82 = vunpack.c.h.bf16 %v30
  %v83 = vunpack.c.l.bf16 %v31
  %v84 = vunpack.c.h.bf16 %v31
  %v85 = vunpack.c.l.bf16 %v32
  %v86 = vunpack.c.h.bf16 %v32
  %v87 = vunpack.c.l.bf16 %v33
  %v88 = vunpack.c.h.bf16 %v33
  %v89 = vunpack.c.l.bf16 %v34
  %v90 = vunpack.c.h.bf16 %v34
  %v91 = vunpack.c.l.bf16 %v35
  %v92 = vunpack.c.h.bf16 %v35
  %v93 = vunpack.c.l.bf16 %v36
  %v94 = vunpack.c.h.bf16 %v36
  %v95 = vunpack.c.l.bf16 %v37
  %v96 = vunpack.c.h.bf16 %v37
  %v97 = vunpack.c.l.bf16 %v38
  %v98 = vunpack.c.h.bf16 %v38
  %v99 = vunpack.c.l.bf16 %v39
  %v100 = vunpack.c.h.bf16 %v39
  %v101 = vunpack.c.l.bf16 %v40
  %v102 = vunpack.c.h.bf16 %v40
  %v103 = vunpack.c.l.bf16 %v41
  %v104 = vunpack.c.h.bf16 %v41
  %v105 = vunpack.c.l.bf16 %v42
  %v106 = vunpack.c.h.bf16 %v42
  %v107 = vld [vmem:[%s1] sm:$0xff]
  %v108 = vld [vmem:[%s1 + $0x8] sm:$0xff]
  %v109 = vld [vmem:[%s1 + $0x10] sm:$0xff]
  %v110 = vld [vmem:[%s1 + $0x18] sm:$0xff]
  %v111 = vld [vmem:[%s1 + $0x20] sm:$0xff]
  %v112 = vld [vmem:[%s1 + $0x28] sm:$0xff]
  %v113 = vld [vmem:[%s1 + $0x30] sm:$0xff]
  %v114 = vld [vmem:[%s1 + $0x38] sm:$0xff]
  %v115 = vld [vmem:[%s1 + $0x40] sm:$0xff]
  %v116 = vld [vmem:[%s1 + $0x48] sm:$0xff]
  %v117 = vld [vmem:[%s1 + $0x50] sm:$0xff]
  %v118 = vld [vmem:[%s1 + $0x58] sm:$0xff]
  %v119 = vld [vmem:[%s1 + $0x60] sm:$0xff]
  %v120 = vld [vmem:[%s1 + $0x68] sm:$0xff]
  %v121 = vld [vmem:[%s1 + $0x70] sm:$0xff]
  %v122 = vld [vmem:[%s1 + $0x78] sm:$0xff]
  %v123 = vld [vmem:[%s1 + $0x80] sm:$0xff]
  %v124 = vld [vmem:[%s1 + $0x88] sm:$0xff]
  %v125 = vld [vmem:[%s1 + $0x90] sm:$0xff]
  %v126 = vld [vmem:[%s1 + $0x98] sm:$0xff]
  %v127 = vld [vmem:[%s1 + $0xa0] sm:$0xff]
  %v128 = vld [vmem:[%s1 + $0xa8] sm:$0xff]
  %v129 = vld [vmem:[%s1 + $0xb0] sm:$0xff]
  %v130 = vld [vmem:[%s1 + $0xb8] sm:$0xff]
  %v131 = vld [vmem:[%s1 + $0xc0] sm:$0xff]
  %v132 = vld [vmem:[%s1 + $0xc8] sm:$0xff]
  %v133 = vld [vmem:[%s1 + $0xd0] sm:$0xff]
  %v134 = vld [vmem:[%s1 + $0xd8] sm:$0xff]
  %v135 = vld [vmem:[%s1 + $0xe0] sm:$0xff]
  %v136 = vld [vmem:[%s1 + $0xe8] sm:$0xff]
  %v137 = vld [vmem:[%s1 + $0xf0] sm:$0xff]
  %v138 = vld [vmem:[%s1 + $0xf8] sm:$0xff]
  %v139 = vunpack.c.l.bf16 %v107
  %v140 = vunpack.c.h.bf16 %v107
  %v141 = vunpack.c.l.bf16 %v108
  %v142 = vunpack.c.h.bf16 %v108
  %v143 = vunpack.c.l.bf16 %v109
  %v144 = vunpack.c.h.bf16 %v109
  %v145 = vunpack.c.l.bf16 %v110
  %v146 = vunpack.c.h.bf16 %v110
  %v147 = vunpack.c.l.bf16 %v111
  %v148 = vunpack.c.h.bf16 %v111
  %v149 = vunpack.c.l.bf16 %v112
  %v150 = vunpack.c.h.bf16 %v112
  %v151 = vunpack.c.l.bf16 %v113
  %v152 = vunpack.c.h.bf16 %v113
  %v153 = vunpack.c.l.bf16 %v114
  %v154 = vunpack.c.h.bf16 %v114
  %v155 = vunpack.c.l.bf16 %v115
  %v156 = vunpack.c.h.bf16 %v115
  %v157 = vunpack.c.l.bf16 %v116
  %v158 = vunpack.c.h.bf16 %v116
  %v159 = vunpack.c.l.bf16 %v117
  %v160 = vunpack.c.h.bf16 %v117
  %v161 = vunpack.c.l.bf16 %v118
  %v162 = vunpack.c.h.bf16 %v118
  %v163 = vunpack.c.l.bf16 %v119
  %v164 = vunpack.c.h.bf16 %v119
  %v165 = vunpack.c.l.bf16 %v120
  %v166 = vunpack.c.h.bf16 %v120
  %v167 = vunpack.c.l.bf16 %v121
  %v168 = vunpack.c.h.bf16 %v121
  %v169 = vunpack.c.l.bf16 %v122
  %v170 = vunpack.c.h.bf16 %v122
  %v171 = vunpack.c.l.bf16 %v123
  %v172 = vunpack.c.h.bf16 %v123
  %v173 = vunpack.c.l.bf16 %v124
  %v174 = vunpack.c.h.bf16 %v124
  %v175 = vunpack.c.l.bf16 %v125
  %v176 = vunpack.c.h.bf16 %v125
  %v177 = vunpack.c.l.bf16 %v126
  %v178 = vunpack.c.h.bf16 %v126
  %v179 = vunpack.c.l.bf16 %v127
  %v180 = vunpack.c.h.bf16 %v127
  %v181 = vunpack.c.l.bf16 %v128
  %v182 = vunpack.c.h.bf16 %v128
  %v183 = vunpack.c.l.bf16 %v129
  %v184 = vunpack.c.h.bf16 %v129
  %v185 = vunpack.c.l.bf16 %v130
  %v186 = vunpack.c.h.bf16 %v130
  %v187 = vunpack.c.l.bf16 %v131
  %v188 = vunpack.c.h.bf16 %v131
  %v189 = vunpack.c.l.bf16 %v132
  %v190 = vunpack.c.h.bf16 %v132
  %v191 = vunpack.c.l.bf16 %v133
  %v192 = vunpack.c.h.bf16 %v133
  %v193 = vunpack.c.l.bf16 %v134
  %v194 = vunpack.c.h.bf16 %v134
  %v195 = vunpack.c.l.bf16 %v135
  %v196 = vunpack.c.h.bf16 %v135
  %v197 = vunpack.c.l.bf16 %v136
  %v198 = vunpack.c.h.bf16 %v136
  %v199 = vunpack.c.l.bf16 %v137
  %v200 = vunpack.c.h.bf16 %v137
  %v201 = vunpack.c.l.bf16 %v138
  %v202 = vunpack.c.h.bf16 %v138
  %v203 = vmul.f32 %v43, %v139
  %v204 = vmul.f32 %v44, %v140
  %v205 = vmul.f32 %v45, %v141
  %v206 = vmul.f32 %v46, %v142
  %v207 = vmul.f32 %v47, %v143
  %v208 = vmul.f32 %v48, %v144
  %v209 = vmul.f32 %v49, %v145
  %v210 = vmul.f32 %v50, %v146
  %v211 = vmul.f32 %v51, %v147
  %v212 = vmul.f32 %v52, %v148
  %v213 = vmul.f32 %v53, %v149
  %v214 = vmul.f32 %v54, %v150
  %v215 = vmul.f32 %v55, %v151
  %v216 = vmul.f32 %v56, %v152
  %v217 = vmul.f32 %v57, %v153
  %v218 = vmul.f32 %v58, %v154
  %v219 = vmul.f32 %v59, %v155
  %v220 = vmul.f32 %v60, %v156
  %v221 = vmul.f32 %v61, %v157
  %v222 = vmul.f32 %v62, %v158
  %v223 = vmul.f32 %v63, %v159
  %v224 = vmul.f32 %v64, %v160
  %v225 = vmul.f32 %v65, %v161
  %v226 = vmul.f32 %v66, %v162
  %v227 = vmul.f32 %v67, %v163
  %v228 = vmul.f32 %v68, %v164
  %v229 = vmul.f32 %v69, %v165
  %v230 = vmul.f32 %v70, %v166
  %v231 = vmul.f32 %v71, %v167
  %v232 = vmul.f32 %v72, %v168
  %v233 = vmul.f32 %v73, %v169
  %v234 = vmul.f32 %v74, %v170
  %v235 = vmul.f32 %v75, %v171
  %v236 = vmul.f32 %v76, %v172
  %v237 = vmul.f32 %v77, %v173
  %v238 = vmul.f32 %v78, %v174
  %v239 = vmul.f32 %v79, %v175
  %v240 = vmul.f32 %v80, %v176
  %v241 = vmul.f32 %v81, %v177
  %v242 = vmul.f32 %v82, %v178
  %v243 = vmul.f32 %v83, %v179
  %v244 = vmul.f32 %v84, %v180
  %v245 = vmul.f32 %v85, %v181
  %v246 = vmul.f32 %v86, %v182
  %v247 = vmul.f32 %v87, %v183
  %v248 = vmul.f32 %v88, %v184
  %v249 = vmul.f32 %v89, %v185
  %v250 = vmul.f32 %v90, %v186
  %v251 = vmul.f32 %v91, %v187
  %v252 = vmul.f32 %v92, %v188
  %v253 = vmul.f32 %v93, %v189
  %v254 = vmul.f32 %v94, %v190
  %v255 = vmul.f32 %v95, %v191
  %v256 = vmul.f32 %v96, %v192
  %v257 = vmul.f32 %v97, %v193
  %v258 = vmul.f32 %v98, %v194
  %v259 = vmul.f32 %v99, %v195
  %v260 = vmul.f32 %v100, %v196
  %v261 = vmul.f32 %v101, %v197
  %v262 = vmul.f32 %v102, %v198
  %v263 = vmul.f32 %v103, %v199
  %v264 = vmul.f32 %v104, %v200
  %v265 = vmul.f32 %v105, %v201
  %v266 = vmul.f32 %v106, %v202
  %v267 = vadd.f32 %v203, %v204
  %v268 = vadd.f32 %v267, %v205
  %v269 = vadd.f32 %v268, %v206
  %270 = vadd.xlane.f32.xlu0 %v269
  %v271 = vpop.xlane.xlu0 %270
  %v272 = vadd.f32 %v207, %v208
  %v273 = vadd.f32 %v272, %v209
  %v274 = vadd.f32 %v273, %v210
  %275 = vadd.xlane.f32.xlu0 %v274
  %v276 = vpop.xlane.xlu0 %275
  %v277 = vadd.f32 %v211, %v212
  %v278 = vadd.f32 %v277, %v213
  %v279 = vadd.f32 %v278, %v214
  %280 = vadd.xlane.f32.xlu0 %v279
  %v281 = vpop.xlane.xlu0 %280
  %v282 = vadd.f32 %v215, %v216
  %v283 = vadd.f32 %v282, %v217
  %v284 = vadd.f32 %v283, %v218
  %285 = vadd.xlane.f32.xlu0 %v284
  %v286 = vpop.xlane.xlu0 %285
  %v287 = vadd.f32 %v219, %v220
  %v288 = vadd.f32 %v287, %v221
  %v289 = vadd.f32 %v288, %v222
  %290 = vadd.xlane.f32.xlu0 %v289
  %v291 = vpop.xlane.xlu0 %290
  %v292 = vadd.f32 %v223, %v224
  %v293 = vadd.f32 %v292, %v225
  %v294 = vadd.f32 %v293, %v226
  %295 = vadd.xlane.f32.xlu0 %v294
  %v296 = vpop.xlane.xlu0 %295
  %v297 = vadd.f32 %v227, %v228
  %v298 = vadd.f32 %v297, %v229
  %v299 = vadd.f32 %v298, %v230
  %300 = vadd.xlane.f32.xlu0 %v299
  %v301 = vpop.xlane.xlu0 %300
  %v302 = vadd.f32 %v231, %v232
  %v303 = vadd.f32 %v302, %v233
  %v304 = vadd.f32 %v303, %v234
  %305 = vadd.xlane.f32.xlu0 %v304
  %v306 = vpop.xlane.xlu0 %305
  %v307 = vadd.f32 %v235, %v236
  %v308 = vadd.f32 %v307, %v237
  %v309 = vadd.f32 %v308, %v238
  %310 = vadd.xlane.f32.xlu0 %v309
  %v311 = vpop.xlane.xlu0 %310
  %v312 = vadd.f32 %v239, %v240
  %v313 = vadd.f32 %v312, %v241
  %v314 = vadd.f32 %v313, %v242
  %315 = vadd.xlane.f32.xlu0 %v314
  %v316 = vpop.xlane.xlu0 %315
  %v317 = vadd.f32 %v243, %v244
  %v318 = vadd.f32 %v317, %v245
  %v319 = vadd.f32 %v318, %v246
  %320 = vadd.xlane.f32.xlu0 %v319
  %v321 = vpop.xlane.xlu0 %320
  %v322 = vadd.f32 %v247, %v248
  %v323 = vadd.f32 %v322, %v249
  %v324 = vadd.f32 %v323, %v250
  %325 = vadd.xlane.f32.xlu0 %v324
  %v326 = vpop.xlane.xlu0 %325
  %v327 = vadd.f32 %v251, %v252
  %v328 = vadd.f32 %v327, %v253
  %v329 = vadd.f32 %v328, %v254
  %330 = vadd.xlane.f32.xlu0 %v329
  %v331 = vpop.xlane.xlu0 %330
  %v332 = vadd.f32 %v255, %v256
  %v333 = vadd.f32 %v332, %v257
  %v334 = vadd.f32 %v333, %v258
  %335 = vadd.xlane.f32.xlu0 %v334
  %v336 = vpop.xlane.xlu0 %335
  %v337 = vadd.f32 %v259, %v260
  %v338 = vadd.f32 %v337, %v261
  %v339 = vadd.f32 %v338, %v262
  %340 = vadd.xlane.f32.xlu0 %v339
  %v341 = vpop.xlane.xlu0 %340
  %v342 = vadd.f32 %v263, %v264
  %v343 = vadd.f32 %v342, %v265
  %v344 = vadd.f32 %v343, %v266
  %345 = vadd.xlane.f32.xlu0 %v344
  %v346 = vpop.xlane.xlu0 %345
  %v347 = vmul.f32 %v271, 0.25
  %v348 = vmul.f32 %v276, 0.25
  %v349 = vmul.f32 %v281, 0.25
  %v350 = vmul.f32 %v286, 0.25
  %v351 = vmul.f32 %v291, 0.25
  %v352 = vmul.f32 %v296, 0.25
  %v353 = vmul.f32 %v301, 0.25
  %v354 = vmul.f32 %v306, 0.25
  %v355 = vmul.f32 %v311, 0.25
  %v356 = vmul.f32 %v316, 0.25
  %v357 = vmul.f32 %v321, 0.25
  %v358 = vmul.f32 %v326, 0.25
  %v359 = vmul.f32 %v331, 0.25
  %v360 = vmul.f32 %v336, 0.25
  %v361 = vmul.f32 %v341, 0.25
  %v362 = vmul.f32 %v346, 0.25
  %v379 = vlaneseq
  %v380 = vand.u32 %v379, 127
  %v381 = vlaneseq
  %v382 = vshrl.u32 %v381, 7
  %v383 = vsub.s32 %v380, %v382
  %v384 = vrot.slane %v347, %v383
  %v385 = vadd.s32 %v380, 4294967288
  %v386 = vlaneseq
  %v387 = vshrl.u32 %v386, 7
  %v388 = vsub.s32 %v385, %v387
  %v389 = vrot.slane %v348, %v388
  %vm390 = vcmask 130112
  %v391 = vsel %vm390, %v389, %v384
  %v392 = vadd.s32 %v380, 4294967280
  %v393 = vlaneseq
  %v394 = vshrl.u32 %v393, 7
  %v395 = vsub.s32 %v392, %v394
  %v396 = vrot.slane %v349, %v395
  %vm397 = vcmask 195712
  %v398 = vsel %vm397, %v396, %v391
  %v399 = vadd.s32 %v380, 4294967272
  %v400 = vlaneseq
  %v401 = vshrl.u32 %v400, 7
  %v402 = vsub.s32 %v399, %v401
  %v403 = vrot.slane %v350, %v402
  %vm404 = vcmask 261312
  %v405 = vsel %vm404, %v403, %v398
  %v406 = vadd.s32 %v380, 4294967264
  %v407 = vlaneseq
  %v408 = vshrl.u32 %v407, 7
  %v409 = vsub.s32 %v406, %v408
  %v410 = vrot.slane %v351, %v409
  %vm411 = vcmask 326912
  %v412 = vsel %vm411, %v410, %v405
  %v413 = vadd.s32 %v380, 4294967256
  %v414 = vlaneseq
  %v415 = vshrl.u32 %v414, 7
  %v416 = vsub.s32 %v413, %v415
  %v417 = vrot.slane %v352, %v416
  %vm418 = vcmask 392512
  %v419 = vsel %vm418, %v417, %v412
  %v420 = vadd.s32 %v380, 4294967248
  %v421 = vlaneseq
  %v422 = vshrl.u32 %v421, 7
  %v423 = vsub.s32 %v420, %v422
  %v424 = vrot.slane %v353, %v423
  %vm425 = vcmask 458112
  %v426 = vsel %vm425, %v424, %v419
  %v427 = vadd.s32 %v380, 4294967240
  %v428 = vlaneseq
  %v429 = vshrl.u32 %v428, 7
  %v430 = vsub.s32 %v427, %v429
  %v431 = vrot.slane %v354, %v430
  %vm432 = vcmask 523712
  %v433 = vsel %vm432, %v431, %v426
  %v434 = vadd.s32 %v380, 4294967232
  %v435 = vlaneseq
  %v436 = vshrl.u32 %v435, 7
  %v437 = vsub.s32 %v434, %v436
  %v438 = vrot.slane %v355, %v437
  %vm439 = vcmask 589312
  %v440 = vsel %vm439, %v438, %v433
  %v441 = vadd.s32 %v380, 4294967224
  %v442 = vlaneseq
  %v443 = vshrl.u32 %v442, 7
  %v444 = vsub.s32 %v441, %v443
  %v445 = vrot.slane %v356, %v444
  %vm446 = vcmask 654912
  %v447 = vsel %vm446, %v445, %v440
  %v448 = vadd.s32 %v380, 4294967216
  %v449 = vlaneseq
  %v450 = vshrl.u32 %v449, 7
  %v451 = vsub.s32 %v448, %v450
  %v452 = vrot.slane %v357, %v451
  %vm453 = vcmask 720512
  %v454 = vsel %vm453, %v452, %v447
  %v455 = vadd.s32 %v380, 4294967208
  %v456 = vlaneseq
  %v457 = vshrl.u32 %v456, 7
  %v458 = vsub.s32 %v455, %v457
  %v459 = vrot.slane %v358, %v458
  %vm460 = vcmask 786112
  %v461 = vsel %vm460, %v459, %v454
  %v462 = vadd.s32 %v380, 4294967200
  %v463 = vlaneseq
  %v464 = vshrl.u32 %v463, 7
  %v465 = vsub.s32 %v462, %v464
  %v466 = vrot.slane %v359, %v465
  %vm467 = vcmask 851712
  %v468 = vsel %vm467, %v466, %v461
  %v469 = vadd.s32 %v380, 4294967192
  %v470 = vlaneseq
  %v471 = vshrl.u32 %v470, 7
  %v472 = vsub.s32 %v469, %v471
  %v473 = vrot.slane %v360, %v472
  %vm474 = vcmask 917312
  %v475 = vsel %vm474, %v473, %v468
  %v476 = vadd.s32 %v380, 4294967184
  %v477 = vlaneseq
  %v478 = vshrl.u32 %v477, 7
  %v479 = vsub.s32 %v476, %v478
  %v480 = vrot.slane %v361, %v479
  %vm481 = vcmask 982912
  %v482 = vsel %vm481, %v480, %v475
  %v483 = vadd.s32 %v380, 4294967176
  %v484 = vlaneseq
  %v485 = vshrl.u32 %v484, 7
  %v486 = vsub.s32 %v483, %v485
  %v487 = vrot.slane %v362, %v486
  %vm488 = vcmask 1048512
  %v489 = vsel %vm488, %v487, %v482
  %491 = vst [vmem:[%s2] sm:$0x1] %v489
  // Predicated region
  $region10: #{_togl_forward_impl.11} parent=0 // pred_check
    _
  $region11: #{_togl_forward_impl.11} parent=0 // pred_check_branch
    %493 = sbr.rel (0) target = $region13
  $region12: #{_togl_forward_impl.11} parent=0 // pred_region
    _
  $region13: #{_togl_forward_impl.11} parent=0 // pred_fallthru
    _
  // Predicated region
  $region14: #{_togl_forward_impl.11} parent=0 // pred_check
    _
  $region15: #{_togl_forward_impl.11} parent=0 // pred_check_branch
    %495 = sbr.rel (0) target = $region17
  $region16: #{_togl_forward_impl.11} parent=0 // pred_region
    _
  $region17: #{_togl_forward_impl.11} parent=0 // pred_fallthru
    _

</llo_original>
